<compile_context>
chip_gen: v7x
topology: tpu7x:2x2x1
jax: 0.10.0
libtpu: 0.0.40
codegen_flags: <defaults>
</compile_context>

<pallas_src>
import functools

import jax
import jax.numpy as jnp
import numpy as np
from jax.experimental import pallas as pl
from jax.experimental.pallas import tpu as pltpu

MXU_DTYPE = jnp.bfloat16  # bf16 MXU operands on v5e/v6e/v7x; accumulation stays f32.

_VMEM = pl.BlockSpec(memory_space=pltpu.MemorySpace.VMEM)


def _round_up(x, m):
    return ((x + m - 1) // m) * m


# ----------------------------------------------------------------------------
# Fused Pallas kernel: embedding gather + n_layers LSTM cells + linear head
# ----------------------------------------------------------------------------
def _make_fused_kernel(n_layers, hp):
    def kernel(*refs):
        tok_ref, h0_ref, c0_ref, emb_ref = refs[:4]
        w_ih = refs[4:4 + n_layers]                     # [in_p, 4*Hp]   bf16
        w_hh = refs[4 + n_layers:4 + 2 * n_layers]      # [Hp,   4*Hp]   bf16
        b_g = refs[4 + 2 * n_layers:4 + 3 * n_layers]   # [1,    4*Hp]   f32
        w_out_ref = refs[4 + 3 * n_layers]              # [Hp,   Vp]     bf16
        b_out_ref = refs[5 + 3 * n_layers]              # [1,    Vp]     f32
        pred_ref, h_out_ref, c_out_ref = refs[6 + 3 * n_layers:]

        bp = tok_ref.shape[0]
        vp = emb_ref.shape[0]

        # ---- embedding lookup as one-hot @ table (pure MXU, no dyn indexing) ----
        col = jax.lax.broadcasted_iota(jnp.int32, (bp, vp), 1)
        onehot = (col == tok_ref[...]).astype(MXU_DTYPE)           # [Bp, Vp]
        x = jnp.dot(onehot, emb_ref[...],
                    preferred_element_type=jnp.float32)            # [Bp, Ep] f32
        # self.dropout(embedded): identity in eval mode.
        # TODO(synk): training-mode dropout (pltpu.prng_* Bernoulli mask) not implemented.

        # ---- stacked LSTM, unrolled over layers; state never leaves VMEM ----
        for l in range(n_layers):
            h_prev = h0_ref[l]                                     # [Bp, Hp] f32
            c_prev = c0_ref[l]
            gates = (jnp.dot(x.astype(MXU_DTYPE), w_ih[l][...],
                             preferred_element_type=jnp.float32)
                     + jnp.dot(h_prev.astype(MXU_DTYPE), w_hh[l][...],
                               preferred_element_type=jnp.float32)
                     + b_g[l][...])                                # [Bp, 4*Hp] f32
            # Hp is a multiple of 128 -> lane-aligned gate slices (order i,f,g,o).
            i_g = jax.nn.sigmoid(gates[:, 0 * hp:1 * hp])
            f_g = jax.nn.sigmoid(gates[:, 1 * hp:2 * hp])
            g_g = jnp.tanh(gates[:, 2 * hp:3 * hp])
            o_g = jax.nn.sigmoid(gates[:, 3 * hp:4 * hp])
            c_new = f_g * c_prev + i_g * g_g
            h_new = o_g * jnp.tanh(c_new)
            h_out_ref[l] = h_new
            c_out_ref[l] = c_new
            x = h_new   # inter-layer dropout: identity in eval mode

        # ---- output projection (lane-dense Vp-wide store) ----
        pred_ref[...] = (jnp.dot(x.astype(MXU_DTYPE), w_out_ref[...],
                                 preferred_element_type=jnp.float32)
                         + b_out_ref[...])

    return kernel


# ----------------------------------------------------------------------------
# Parameter construction (raw PyTorch layout) + kernel-layout packing
# ----------------------------------------------------------------------------
def init_params(key, output_dim, emb_dim, hid_dim, n_layers):
    """Raw PyTorch-layout f32 parameters (nn.Embedding / nn.LSTM / nn.Linear init)."""
    k_emb, k_lstm, k_out = jax.random.split(key, 3)
    raw = {"embedding": jax.random.normal(k_emb, (output_dim, emb_dim), jnp.float32)}

    bound = 1.0 / np.sqrt(hid_dim)
    w_ih, w_hh, b_ih, b_hh = [], [], [], []
    keys = jax.random.split(k_lstm, 4 * n_layers)
    for l in range(n_layers):
        in_dim = emb_dim if l == 0 else hid_dim
        k0, k1, k2, k3 = keys[4 * l:4 * l + 4]
        w_ih.append(jax.random.uniform(k0, (4 * hid_dim, in_dim), jnp.float32, -bound, bound))
        w_hh.append(jax.random.uniform(k1, (4 * hid_dim, hid_dim), jnp.float32, -bound, bound))
        b_ih.append(jax.random.uniform(k2, (4 * hid_dim,), jnp.float32, -bound, bound))
        b_hh.append(jax.random.uniform(k3, (4 * hid_dim,), jnp.float32, -bound, bound))
    raw.update(w_ih=w_ih, w_hh=w_hh, b_ih=b_ih, b_hh=b_hh)

    k0, k1 = jax.random.split(k_out)
    raw["w_out"] = jax.random.uniform(k0, (output_dim, hid_dim), jnp.float32, -bound, bound)
    raw["b_out"] = jax.random.uniform(k1, (output_dim,), jnp.float32, -bound, bound)
    return raw


def _pack_lstm_w(w, h, hp, in_dim, in_p):
    # w: [4H, in_dim], PyTorch gate order (i, f, g, o). Pack so that the kernel
    # computes x @ W with each gate block starting at a 128-lane boundary.
    w4 = w.reshape(4, h, in_dim)
    w4 = jnp.pad(w4, ((0, 0), (0, hp - h), (0, in_p - in_dim)))
    return jnp.transpose(w4, (2, 0, 1)).reshape(in_p, 4 * hp).astype(MXU_DTYPE)


def _pack_lstm_b(b_ih, b_hh, h, hp):
    b = (b_ih + b_hh).reshape(4, h)
    b = jnp.pad(b, ((0, 0), (0, hp - h)))
    return b.reshape(1, 4 * hp).astype(jnp.float32)


def pack_params(raw, output_dim, emb_dim, hid_dim, n_layers):
    """Pad to lane-/sublane-friendly shapes, pre-transpose, cast matmul weights to bf16."""
    ep = _round_up(emb_dim, 128)
    hp = _round_up(hid_dim, 128)
    vp = _round_up(output_dim, 128)

    packed = {}
    emb = jnp.zeros((vp, ep), jnp.float32).at[:output_dim, :emb_dim].set(raw["embedding"])
    packed["embedding"] = emb.astype(MXU_DTYPE)

    w_ih_t, w_hh_t, b_l = [], [], []
    for l in range(n_layers):
        in_dim = emb_dim if l == 0 else hid_dim
        in_p = ep if l == 0 else hp
        w_ih_t.append(_pack_lstm_w(raw["w_ih"][l], hid_dim, hp, in_dim, in_p))
        w_hh_t.append(_pack_lstm_w(raw["w_hh"][l], hid_dim, hp, hid_dim, hp))
        b_l.append(_pack_lstm_b(raw["b_ih"][l], raw["b_hh"][l], hid_dim, hp))
    packed["w_ih_t"] = w_ih_t
    packed["w_hh_t"] = w_hh_t
    packed["b_lstm"] = b_l

    w_out_t = jnp.zeros((hp, vp), jnp.float32).at[:hid_dim, :output_dim].set(raw["w_out"].T)
    packed["w_out_t"] = w_out_t.astype(MXU_DTYPE)
    packed["b_out"] = jnp.zeros((1, vp), jnp.float32).at[0, :output_dim].set(raw["b_out"])
    return packed


# ----------------------------------------------------------------------------
# Forward pass: pad -> single fused pallas_call -> slice back
# ----------------------------------------------------------------------------
@functools.partial(jax.jit, static_argnames=("output_dim",))
def decoder_forward(packed, tokens, hidden, cell, *, output_dim):
    n_layers, batch, hid_dim = hidden.shape
    hp = packed["w_hh_t"][0].shape[0]
    vp = packed["w_out_t"].shape[1]
    bp = _round_up(batch, 8)

    tok_p = jnp.zeros((bp, 1), jnp.int32).at[:batch, 0].set(tokens.astype(jnp.int32))
    h_p = jnp.zeros((n_layers, bp, hp), jnp.float32).at[:, :batch, :hid_dim].set(hidden)
    c_p = jnp.zeros((n_layers, bp, hp), jnp.float32).at[:, :batch, :hid_dim].set(cell)

    n_in = 4 + 3 * n_layers + 2
    kernel = _make_fused_kernel(n_layers, hp)
    pred_p, h_out_p, c_out_p = pl.pallas_call(
        kernel,
        out_shape=(jax.ShapeDtypeStruct((bp, vp), jnp.float32),
                   jax.ShapeDtypeStruct((n_layers, bp, hp), jnp.float32),
                   jax.ShapeDtypeStruct((n_layers, bp, hp), jnp.float32)),
        in_specs=[_VMEM] * n_in,
        out_specs=(_VMEM, _VMEM, _VMEM),
    )(tok_p, h_p, c_p, packed["embedding"],
      *packed["w_ih_t"], *packed["w_hh_t"], *packed["b_lstm"],
      packed["w_out_t"], packed["b_out"])

    pred = pred_p[:batch, :output_dim]
    new_h = h_out_p[:, :batch, :hid_dim]
    new_c = c_out_p[:, :batch, :hid_dim]
    return pred, new_h, new_c


# ----------------------------------------------------------------------------
# Pure-JAX f32 reference (PyTorch semantics) for correctness check
# ----------------------------------------------------------------------------
def decoder_ref(raw, tokens, hidden, cell):
    n_layers = len(raw["w_ih"])
    h_dim = hidden.shape[-1]
    x = raw["embedding"][tokens]
    new_h, new_c = [], []
    for l in range(n_layers):
        gates = (x @ raw["w_ih"][l].T + hidden[l] @ raw["w_hh"][l].T
                 + raw["b_ih"][l] + raw["b_hh"][l])
        i_g = jax.nn.sigmoid(gates[:, 0 * h_dim:1 * h_dim])
        f_g = jax.nn.sigmoid(gates[:, 1 * h_dim:2 * h_dim])
        g_g = jnp.tanh(gates[:, 2 * h_dim:3 * h_dim])
        o_g = jax.nn.sigmoid(gates[:, 3 * h_dim:4 * h_dim])
        c_l = f_g * cell[l] + i_g * g_g
        h_l = o_g * jnp.tanh(c_l)
        new_h.append(h_l)
        new_c.append(c_l)
        x = h_l
    pred = x @ raw["w_out"].T + raw["b_out"]
    return pred, jnp.stack(new_h), jnp.stack(new_c)


if __name__ == "__main__":
    # Small, module-consistent shapes.
    output_dim = 16   # vocab size
    emb_dim = 32
    hid_dim = 32
    n_layers = 2
    batch = 2

    key = jax.random.PRNGKey(0)
    k_params, k_tok, k_h, k_c = jax.random.split(key, 4)

    raw = init_params(k_params, output_dim, emb_dim, hid_dim, n_layers)
    packed = pack_params(raw, output_dim, emb_dim, hid_dim, n_layers)

    input_tokens = jax.random.randint(k_tok, (batch,), 0, output_dim, jnp.int32)
    hidden = jax.random.normal(k_h, (n_layers, batch, hid_dim), jnp.float32)
    cell = jax.random.normal(k_c, (n_layers, batch, hid_dim), jnp.float32)

    pred, new_h, new_c = decoder_forward(packed, input_tokens, hidden, cell,
                                         output_dim=output_dim)
    jax.block_until_ready((pred, new_h, new_c))

    # Sanity check against the pure-f32 reference (bf16 MXU -> looser tolerance).
    pred_r, h_r, c_r = decoder_ref(raw, input_tokens, hidden, cell)
    np.testing.assert_allclose(np.asarray(pred), np.asarray(pred_r), atol=2e-2, rtol=2e-2)
    np.testing.assert_allclose(np.asarray(new_h), np.asarray(h_r), atol=2e-2, rtol=2e-2)
    np.testing.assert_allclose(np.asarray(new_c), np.asarray(c_r), atol=2e-2, rtol=2e-2)

    assert pred.shape == (batch, output_dim)
    assert new_h.shape == (n_layers, batch, hid_dim)
    assert new_c.shape == (n_layers, batch, hid_dim)

    print("KERNEL_OK")
</pallas_src>

<mosaic_0001>
module attributes {stable_mosaic.version = 11 : i64} {
  func.func @kernel(%arg0: memref<8x1xi32, #tpu.memory_space<vmem>>, %arg1: memref<2x8x128xf32, #tpu.memory_space<vmem>>, %arg2: memref<2x8x128xf32, #tpu.memory_space<vmem>>, %arg3: memref<128x128xbf16, #tpu.memory_space<vmem>>, %arg4: memref<128x512xbf16, #tpu.memory_space<vmem>>, %arg5: memref<128x512xbf16, #tpu.memory_space<vmem>>, %arg6: memref<128x512xbf16, #tpu.memory_space<vmem>>, %arg7: memref<128x512xbf16, #tpu.memory_space<vmem>>, %arg8: memref<1x512xf32, #tpu.memory_space<vmem>>, %arg9: memref<1x512xf32, #tpu.memory_space<vmem>>, %arg10: memref<128x128xbf16, #tpu.memory_space<vmem>>, %arg11: memref<1x128xf32, #tpu.memory_space<vmem>>, %arg12: memref<8x128xf32, #tpu.memory_space<vmem>>, %arg13: memref<2x8x128xf32, #tpu.memory_space<vmem>>, %arg14: memref<2x8x128xf32, #tpu.memory_space<vmem>>) attributes {dimension_semantics = [], scalar_prefetch = 0 : i64, scratch_operands = 0 : i64, tpu.core_type = #tpu.core_type<tc>} {
    %0 = tpu.iota {dimensions = array<i32: 1>} : vector<8x128xi32>
    %c0 = arith.constant 0 : index
    %c0_0 = arith.constant 0 : index
    %1 = vector.load %arg0[%c0, %c0_0] : memref<8x1xi32, #tpu.memory_space<vmem>>, vector<8x1xi32>
    %2 = vector.broadcast %1 : vector<8x1xi32> to vector<8x128xi32>
    %3 = arith.cmpi eq, %0, %2 : vector<8x128xi32>
    %4 = arith.extui %3 : vector<8x128xi1> to vector<8x128xi32>
    %5 = arith.sitofp %4 : vector<8x128xi32> to vector<8x128xf32>
    %6 = arith.truncf %5 : vector<8x128xf32> to vector<8x128xbf16>
    %c0_1 = arith.constant 0 : index
    %c0_2 = arith.constant 0 : index
    %7 = vector.load %arg3[%c0_1, %c0_2] : memref<128x128xbf16, #tpu.memory_space<vmem>>, vector<128x128xbf16>
    %cst = arith.constant dense<0.000000e+00> : vector<8x128xf32>
    %8 = tpu.matmul %6, %7, %cst {dimension_numbers = #tpu.dot_dimension_numbers<[1], [0], [0], [1], [0, 0, 1, 1], [], []>} : vector<8x128xbf16>, vector<128x128xbf16>, vector<8x128xf32> -> vector<8x128xf32>
    %c0_3 = arith.constant 0 : index
    %c0_4 = arith.constant 0 : index
    %c0_5 = arith.constant 0 : index
    %9 = vector.load %arg1[%c0_3, %c0_4, %c0_5] : memref<2x8x128xf32, #tpu.memory_space<vmem>>, vector<1x8x128xf32>
    %10 = vector.shape_cast %9 : vector<1x8x128xf32> to vector<8x128xf32>
    %c0_6 = arith.constant 0 : index
    %c0_7 = arith.constant 0 : index
    %c0_8 = arith.constant 0 : index
    %11 = vector.load %arg2[%c0_6, %c0_7, %c0_8] : memref<2x8x128xf32, #tpu.memory_space<vmem>>, vector<1x8x128xf32>
    %12 = vector.shape_cast %11 : vector<1x8x128xf32> to vector<8x128xf32>
    %13 = arith.truncf %8 : vector<8x128xf32> to vector<8x128xbf16>
    %c0_9 = arith.constant 0 : index
    %c0_10 = arith.constant 0 : index
    %14 = vector.load %arg4[%c0_9, %c0_10] : memref<128x512xbf16, #tpu.memory_space<vmem>>, vector<128x512xbf16>
    %cst_11 = arith.constant dense<0.000000e+00> : vector<8x512xf32>
    %15 = tpu.matmul %13, %14, %cst_11 {dimension_numbers = #tpu.dot_dimension_numbers<[1], [0], [0], [1], [0, 0, 1, 1], [], []>} : vector<8x128xbf16>, vector<128x512xbf16>, vector<8x512xf32> -> vector<8x512xf32>
    %16 = arith.truncf %10 : vector<8x128xf32> to vector<8x128xbf16>
    %c0_12 = arith.constant 0 : index
    %c0_13 = arith.constant 0 : index
    %17 = vector.load %arg6[%c0_12, %c0_13] : memref<128x512xbf16, #tpu.memory_space<vmem>>, vector<128x512xbf16>
    %cst_14 = arith.constant dense<0.000000e+00> : vector<8x512xf32>
    %18 = tpu.matmul %16, %17, %cst_14 {dimension_numbers = #tpu.dot_dimension_numbers<[1], [0], [0], [1], [0, 0, 1, 1], [], []>} : vector<8x128xbf16>, vector<128x512xbf16>, vector<8x512xf32> -> vector<8x512xf32>
    %19 = arith.addf %15, %18 : vector<8x512xf32>
    %c0_15 = arith.constant 0 : index
    %c0_16 = arith.constant 0 : index
    %20 = vector.load %arg8[%c0_15, %c0_16] : memref<1x512xf32, #tpu.memory_space<vmem>>, vector<1x512xf32>
    %21 = vector.broadcast %20 : vector<1x512xf32> to vector<8x512xf32>
    %22 = arith.addf %19, %21 : vector<8x512xf32>
    %23 = vector.extract_strided_slice %22 {offsets = [0, 0], sizes = [8, 128], strides = [1, 1]} : vector<8x512xf32> to vector<8x128xf32>
    %24 = arith.negf %23 : vector<8x128xf32>
    %25 = math.exp %24 : vector<8x128xf32>
    %cst_17 = arith.constant 1.000000e+00 : f32
    %26 = vector.broadcast %cst_17 : f32 to vector<8x128xf32>
    %27 = arith.addf %26, %25 : vector<8x128xf32>
    %28 = arith.divf %26, %27 : vector<8x128xf32>
    %29 = vector.extract_strided_slice %22 {offsets = [0, 128], sizes = [8, 128], strides = [1, 1]} : vector<8x512xf32> to vector<8x128xf32>
    %30 = arith.negf %29 : vector<8x128xf32>
    %31 = math.exp %30 : vector<8x128xf32>
    %cst_18 = arith.constant 1.000000e+00 : f32
    %32 = vector.broadcast %cst_18 : f32 to vector<8x128xf32>
    %33 = arith.addf %32, %31 : vector<8x128xf32>
    %34 = arith.divf %32, %33 : vector<8x128xf32>
    %35 = vector.extract_strided_slice %22 {offsets = [0, 256], sizes = [8, 128], strides = [1, 1]} : vector<8x512xf32> to vector<8x128xf32>
    %36 = math.tanh %35 : vector<8x128xf32>
    %37 = vector.extract_strided_slice %22 {offsets = [0, 384], sizes = [8, 128], strides = [1, 1]} : vector<8x512xf32> to vector<8x128xf32>
    %38 = arith.negf %37 : vector<8x128xf32>
    %39 = math.exp %38 : vector<8x128xf32>
    %cst_19 = arith.constant 1.000000e+00 : f32
    %40 = vector.broadcast %cst_19 : f32 to vector<8x128xf32>
    %41 = arith.addf %40, %39 : vector<8x128xf32>
    %42 = arith.divf %40, %41 : vector<8x128xf32>
    %43 = arith.mulf %34, %12 : vector<8x128xf32>
    %44 = arith.mulf %28, %36 : vector<8x128xf32>
    %45 = arith.addf %43, %44 : vector<8x128xf32>
    %46 = math.tanh %45 : vector<8x128xf32>
    %47 = arith.mulf %42, %46 : vector<8x128xf32>
    %c0_20 = arith.constant 0 : index
    %c0_21 = arith.constant 0 : index
    %c0_22 = arith.constant 0 : index
    %48 = vector.load %arg13[%c0_20, %c0_21, %c0_22] : memref<2x8x128xf32, #tpu.memory_space<vmem>>, vector<1x8x128xf32>
    %49 = vector.shape_cast %48 : vector<1x8x128xf32> to vector<8x128xf32>
    %50 = vector.shape_cast %47 : vector<8x128xf32> to vector<1x8x128xf32>
    tpu.vector_store %arg13[%c0_20, %c0_21, %c0_22], %50 {strides = array<i32>} : memref<2x8x128xf32, #tpu.memory_space<vmem>>, vector<1x8x128xf32>,
    %c0_23 = arith.constant 0 : index
    %c0_24 = arith.constant 0 : index
    %c0_25 = arith.constant 0 : index
    %51 = vector.load %arg14[%c0_23, %c0_24, %c0_25] : memref<2x8x128xf32, #tpu.memory_space<vmem>>, vector<1x8x128xf32>
    %52 = vector.shape_cast %51 : vector<1x8x128xf32> to vector<8x128xf32>
    %53 = vector.shape_cast %45 : vector<8x128xf32> to vector<1x8x128xf32>
    tpu.vector_store %arg14[%c0_23, %c0_24, %c0_25], %53 {strides = array<i32>} : memref<2x8x128xf32, #tpu.memory_space<vmem>>, vector<1x8x128xf32>,
    %c1 = arith.constant 1 : index
    %c0_26 = arith.constant 0 : index
    %c0_27 = arith.constant 0 : index
    %54 = vector.load %arg1[%c1, %c0_26, %c0_27] : memref<2x8x128xf32, #tpu.memory_space<vmem>>, vector<1x8x128xf32>
    %55 = vector.shape_cast %54 : vector<1x8x128xf32> to vector<8x128xf32>
    %c1_28 = arith.constant 1 : index
    %c0_29 = arith.constant 0 : index
    %c0_30 = arith.constant 0 : index
    %56 = vector.load %arg2[%c1_28, %c0_29, %c0_30] : memref<2x8x128xf32, #tpu.memory_space<vmem>>, vector<1x8x128xf32>
    %57 = vector.shape_cast %56 : vector<1x8x128xf32> to vector<8x128xf32>
    %58 = arith.truncf %47 : vector<8x128xf32> to vector<8x128xbf16>
    %c0_31 = arith.constant 0 : index
    %c0_32 = arith.constant 0 : index
    %59 = vector.load %arg5[%c0_31, %c0_32] : memref<128x512xbf16, #tpu.memory_space<vmem>>, vector<128x512xbf16>
    %cst_33 = arith.constant dense<0.000000e+00> : vector<8x512xf32>
    %60 = tpu.matmul %58, %59, %cst_33 {dimension_numbers = #tpu.dot_dimension_numbers<[1], [0], [0], [1], [0, 0, 1, 1], [], []>} : vector<8x128xbf16>, vector<128x512xbf16>, vector<8x512xf32> -> vector<8x512xf32>
    %61 = arith.truncf %55 : vector<8x128xf32> to vector<8x128xbf16>
    %c0_34 = arith.constant 0 : index
    %c0_35 = arith.constant 0 : index
    %62 = vector.load %arg7[%c0_34, %c0_35] : memref<128x512xbf16, #tpu.memory_space<vmem>>, vector<128x512xbf16>
    %cst_36 = arith.constant dense<0.000000e+00> : vector<8x512xf32>
    %63 = tpu.matmul %61, %62, %cst_36 {dimension_numbers = #tpu.dot_dimension_numbers<[1], [0], [0], [1], [0, 0, 1, 1], [], []>} : vector<8x128xbf16>, vector<128x512xbf16>, vector<8x512xf32> -> vector<8x512xf32>
    %64 = arith.addf %60, %63 : vector<8x512xf32>
    %c0_37 = arith.constant 0 : index
    %c0_38 = arith.constant 0 : index
    %65 = vector.load %arg9[%c0_37, %c0_38] : memref<1x512xf32, #tpu.memory_space<vmem>>, vector<1x512xf32>
    %66 = vector.broadcast %65 : vector<1x512xf32> to vector<8x512xf32>
    %67 = arith.addf %64, %66 : vector<8x512xf32>
    %68 = vector.extract_strided_slice %67 {offsets = [0, 0], sizes = [8, 128], strides = [1, 1]} : vector<8x512xf32> to vector<8x128xf32>
    %69 = arith.negf %68 : vector<8x128xf32>
    %70 = math.exp %69 : vector<8x128xf32>
    %cst_39 = arith.constant 1.000000e+00 : f32
    %71 = vector.broadcast %cst_39 : f32 to vector<8x128xf32>
    %72 = arith.addf %71, %70 : vector<8x128xf32>
    %73 = arith.divf %71, %72 : vector<8x128xf32>
    %74 = vector.extract_strided_slice %67 {offsets = [0, 128], sizes = [8, 128], strides = [1, 1]} : vector<8x512xf32> to vector<8x128xf32>
    %75 = arith.negf %74 : vector<8x128xf32>
    %76 = math.exp %75 : vector<8x128xf32>
    %cst_40 = arith.constant 1.000000e+00 : f32
    %77 = vector.broadcast %cst_40 : f32 to vector<8x128xf32>
    %78 = arith.addf %77, %76 : vector<8x128xf32>
    %79 = arith.divf %77, %78 : vector<8x128xf32>
    %80 = vector.extract_strided_slice %67 {offsets = [0, 256], sizes = [8, 128], strides = [1, 1]} : vector<8x512xf32> to vector<8x128xf32>
    %81 = math.tanh %80 : vector<8x128xf32>
    %82 = vector.extract_strided_slice %67 {offsets = [0, 384], sizes = [8, 128], strides = [1, 1]} : vector<8x512xf32> to vector<8x128xf32>
    %83 = arith.negf %82 : vector<8x128xf32>
    %84 = math.exp %83 : vector<8x128xf32>
    %cst_41 = arith.constant 1.000000e+00 : f32
    %85 = vector.broadcast %cst_41 : f32 to vector<8x128xf32>
    %86 = arith.addf %85, %84 : vector<8x128xf32>
    %87 = arith.divf %85, %86 : vector<8x128xf32>
    %88 = arith.mulf %79, %57 : vector<8x128xf32>
    %89 = arith.mulf %73, %81 : vector<8x128xf32>
    %90 = arith.addf %88, %89 : vector<8x128xf32>
    %91 = math.tanh %90 : vector<8x128xf32>
    %92 = arith.mulf %87, %91 : vector<8x128xf32>
    %c1_42 = arith.constant 1 : index
    %c0_43 = arith.constant 0 : index
    %c0_44 = arith.constant 0 : index
    %93 = vector.load %arg13[%c1_42, %c0_43, %c0_44] : memref<2x8x128xf32, #tpu.memory_space<vmem>>, vector<1x8x128xf32>
    %94 = vector.shape_cast %93 : vector<1x8x128xf32> to vector<8x128xf32>
    %95 = vector.shape_cast %92 : vector<8x128xf32> to vector<1x8x128xf32>
    tpu.vector_store %arg13[%c1_42, %c0_43, %c0_44], %95 {strides = array<i32>} : memref<2x8x128xf32, #tpu.memory_space<vmem>>, vector<1x8x128xf32>,
    %c1_45 = arith.constant 1 : index
    %c0_46 = arith.constant 0 : index
    %c0_47 = arith.constant 0 : index
    %96 = vector.load %arg14[%c1_45, %c0_46, %c0_47] : memref<2x8x128xf32, #tpu.memory_space<vmem>>, vector<1x8x128xf32>
    %97 = vector.shape_cast %96 : vector<1x8x128xf32> to vector<8x128xf32>
    %98 = vector.shape_cast %90 : vector<8x128xf32> to vector<1x8x128xf32>
    tpu.vector_store %arg14[%c1_45, %c0_46, %c0_47], %98 {strides = array<i32>} : memref<2x8x128xf32, #tpu.memory_space<vmem>>, vector<1x8x128xf32>,
    %99 = arith.truncf %92 : vector<8x128xf32> to vector<8x128xbf16>
    %c0_48 = arith.constant 0 : index
    %c0_49 = arith.constant 0 : index
    %100 = vector.load %arg10[%c0_48, %c0_49] : memref<128x128xbf16, #tpu.memory_space<vmem>>, vector<128x128xbf16>
    %cst_50 = arith.constant dense<0.000000e+00> : vector<8x128xf32>
    %101 = tpu.matmul %99, %100, %cst_50 {dimension_numbers = #tpu.dot_dimension_numbers<[1], [0], [0], [1], [0, 0, 1, 1], [], []>} : vector<8x128xbf16>, vector<128x128xbf16>, vector<8x128xf32> -> vector<8x128xf32>
    %c0_51 = arith.constant 0 : index
    %c0_52 = arith.constant 0 : index
    %102 = vector.load %arg11[%c0_51, %c0_52] : memref<1x128xf32, #tpu.memory_space<vmem>>, vector<1x128xf32>
    %103 = vector.broadcast %102 : vector<1x128xf32> to vector<8x128xf32>
    %104 = arith.addf %101, %103 : vector<8x128xf32>
    %c0_53 = arith.constant 0 : index
    %c0_54 = arith.constant 0 : index
    %105 = vector.load %arg12[%c0_53, %c0_54] : memref<8x128xf32, #tpu.memory_space<vmem>>, vector<8x128xf32>
    tpu.vector_store %arg12[%c0_53, %c0_54], %104 {strides = array<i32>} : memref<8x128xf32, #tpu.memory_space<vmem>>, vector<8x128xf32>,
    return
  }
}

</mosaic_0001>

<llo_original>
// kernel: decoder_forward.1
$region0: #{decoder_forward.1}
  #allocation0 [shape = 'u32[]', space=smem, size = 0x4, offset = 0x4, fixed_abs, tag = 'smem constant byte address 0x4 - core index']
  #allocation1 [shape = 'u32[144,128]{1,0:T(1,128)}', space=vmem, size = 0x12000, scoped, tag = 'internal scratch']
  %s0 = inlined_call_operand.vmem [shape: s32[8,1], index: 0, kind: input, shape index: {}]
  %s1 = inlined_call_operand.vmem [shape: f32[2,8,128], index: 1, kind: input, shape index: {}]
  %s2 = inlined_call_operand.vmem [shape: f32[2,8,128], index: 2, kind: input, shape index: {}]
  %s3 = inlined_call_operand.vmem [shape: bf16[128,128], index: 3, kind: input, shape index: {}]
  %s4 = inlined_call_operand.hbm [shape: bf16[128,512], index: 4, kind: input, shape index: {}]
  %s5 = inlined_call_operand.hbm [shape: bf16[128,512], index: 5, kind: input, shape index: {}]
  %s6 = inlined_call_operand.hbm [shape: bf16[128,512], index: 6, kind: input, shape index: {}]
  %s7 = inlined_call_operand.hbm [shape: bf16[128,512], index: 7, kind: input, shape index: {}]
  %s8 = inlined_call_operand.vmem [shape: f32[1,512], index: 8, kind: input, shape index: {}]
  %s9 = inlined_call_operand.hbm [shape: f32[1,512], index: 9, kind: input, shape index: {}]
  %s10 = inlined_call_operand.hbm [shape: bf16[128,128], index: 10, kind: input, shape index: {}]
  %s11 = inlined_call_operand.vmem [shape: f32[1,128], index: 11, kind: input, shape index: {}]
  %s12 = inlined_call_operand.vmem [shape: f32[8,128], index: 12, kind: output, shape index: {0}]
  %s13 = inlined_call_operand.vmem [shape: f32[2,8,128], index: 13, kind: output, shape index: {1}]
  %s14 = inlined_call_operand.vmem [shape: f32[2,8,128], index: 14, kind: output, shape index: {2}]
  %15 = xla_tuple %s12, %s13, %s14
  %s16 = sld [smem:[#allocation0]]
  $region98: #{decoder_forward.1} parent=0
    _
  %s18 = ssub.s32 1, %s16
  %s19 = scalar_select 0, %s18, %s16
  $region1: #{decoder_forward.1} parent=0
    #allocation2 [shape = 'u8[131072]{0}', space=vmem, size = 0x20000, scoped, tag = 'input window, operand 4, single buffered']
    #allocation3 [shape = 's32[1]{0}', space=sflag, size = 0x4, scoped, tag = 'scoped memory for decoder_forward.1']
    #allocation4 [shape = 'u8[131072]{0}', space=vmem, size = 0x20000, scoped, tag = 'input window, operand 5, single buffered']
    #allocation5 [shape = 's32[1]{0}', space=sflag, size = 0x4, scoped, tag = 'scoped memory for decoder_forward.1']
    #allocation6 [shape = 'u8[131072]{0}', space=vmem, size = 0x20000, scoped, tag = 'input window, operand 6, single buffered']
    #allocation7 [shape = 'u8[131072]{0}', space=vmem, size = 0x20000, scoped, tag = 'input window, operand 7, single buffered']
    #allocation8 [shape = 's32[1]{0}', space=sflag, size = 0x4, scoped, tag = 'scoped memory for decoder_forward.1']
    #allocation9 [shape = 'u8[2048]{0}', space=vmem, size = 0x800, scoped, tag = 'input window, operand 9, single buffered']
    #allocation10 [shape = 'u8[32768]{0}', space=vmem, size = 0x8000, scoped, tag = 'input window, operand 10, single buffered']
    #allocation11 [shape = 's32[1]{0}', space=sflag, size = 0x4, scoped, tag = 'scoped memory for decoder_forward.1']
    %20 = vsyncpa [#allocation3], 0
    %21 = vsyncpa [#allocation5], 0
    %22 = vsyncpa [#allocation8], 0
    %23 = vsyncpa [#allocation11], 0
    // Predicated region
    $region2: #{decoder_forward.1} parent=1 // pred_check
      _
    $region3: #{decoder_forward.1} parent=1 // pred_check_branch
      %25 = sbr.rel (0) target = $region5
    $region4: #{decoder_forward.1} parent=1 // pred_region
      _
    $region5: #{decoder_forward.1} parent=1 // pred_fallthru
      _
    // Predicated region
    $region6: #{decoder_forward.1} parent=1 // pred_check
      _
    $region7: #{decoder_forward.1} parent=1 // pred_check_branch
      %27 = sbr.rel (0) target = $region9
    $region8: #{decoder_forward.1} parent=1 // pred_region
      _
    $region9: #{decoder_forward.1} parent=1 // pred_fallthru
      _
    // Predicated region
    $region10: #{decoder_forward.1} parent=1 // pred_check
      _
    $region11: #{decoder_forward.1} parent=1 // pred_check_branch
      %29 = sbr.rel (0) target = $region13
    $region12: #{decoder_forward.1} parent=1 // pred_region
      _
    $region13: #{decoder_forward.1} parent=1 // pred_fallthru
      _
    // Predicated region
    $region14: #{decoder_forward.1} parent=1 // pred_check
      _
    $region15: #{decoder_forward.1} parent=1 // pred_check_branch
      %31 = sbr.rel (0) target = $region17
    $region16: #{decoder_forward.1} parent=1 // pred_region
      _
    $region17: #{decoder_forward.1} parent=1 // pred_fallthru
      _
    // Predicated region
    $region18: #{decoder_forward.1} parent=1 // pred_check
      _
    $region19: #{decoder_forward.1} parent=1 // pred_check_branch
      %33 = sbr.rel (0) target = $region21
    $region20: #{decoder_forward.1} parent=1 // pred_region
      %s35 = ssub.s32 4096, 4096
      %36 = vsyncadd [#allocation3], %s35
      %s37 = sshll.u32 [#allocation2], 4
      %s38 = int_to_ptr.vmem [resolvable:$true] %s37
      %43 = dma.hbm_to_vmem [thread:$0]  %s4, 4096, %s38, [#allocation3], 256, 256, 16
    $region21: #{decoder_forward.1} parent=1 // pred_fallthru
      _
    // Predicated region
    $region22: #{decoder_forward.1} parent=1 // pred_check
      _
    $region23: #{decoder_forward.1} parent=1 // pred_check_branch
      %45 = sbr.rel (0) target = $region25
    $region24: #{decoder_forward.1} parent=1 // pred_region
      %s47 = ssub.s32 4096, 4096
      %48 = vsyncadd [#allocation5], %s47
      %s49 = sshll.u32 [#allocation4], 4
      %s50 = int_to_ptr.vmem [resolvable:$true] %s49
      %55 = dma.hbm_to_vmem [thread:$0]  %s5, 4096, %s50, [#allocation5], 256, 256, 16
    $region25: #{decoder_forward.1} parent=1 // pred_fallthru
      _
    // Predicated region
    $region26: #{decoder_forward.1} parent=1 // pred_check
      _
    $region27: #{decoder_forward.1} parent=1 // pred_check_branch
      %57 = sbr.rel (0) target = $region29
    $region28: #{decoder_forward.1} parent=1 // pred_region
      %s59 = ssub.s32 4096, 4096
      %60 = vsyncadd [#allocation5], %s59
      %s61 = sshll.u32 [#allocation6], 4
      %s62 = int_to_ptr.vmem [resolvable:$true] %s61
      %67 = dma.hbm_to_vmem [thread:$0]  %s6, 4096, %s62, [#allocation5], 256, 256, 16
    $region29: #{decoder_forward.1} parent=1 // pred_fallthru
      _
    // Predicated region
    $region30: #{decoder_forward.1} parent=1 // pred_check
      _
    $region31: #{decoder_forward.1} parent=1 // pred_check_branch
      %69 = sbr.rel (0) target = $region33
    $region32: #{decoder_forward.1} parent=1 // pred_region
      %s71 = ssub.s32 4096, 4096
      %72 = vsyncadd [#allocation8], %s71
      %s73 = sshll.u32 [#allocation7], 4
      %s74 = int_to_ptr.vmem [resolvable:$true] %s73
      %79 = dma.hbm_to_vmem [thread:$0]  %s7, 4096, %s74, [#allocation8], 256, 256, 16
    $region33: #{decoder_forward.1} parent=1 // pred_fallthru
      _
    // Predicated region
    $region34: #{decoder_forward.1} parent=1 // pred_check
      _
    $region35: #{decoder_forward.1} parent=1 // pred_check_branch
      %81 = sbr.rel (0) target = $region37
    $region36: #{decoder_forward.1} parent=1 // pred_region
      _
    $region37: #{decoder_forward.1} parent=1 // pred_fallthru
      _
    // Predicated region
    $region38: #{decoder_forward.1} parent=1 // pred_check
      _
    $region39: #{decoder_forward.1} parent=1 // pred_check_branch
      %83 = sbr.rel (0) target = $region41
    $region40: #{decoder_forward.1} parent=1 // pred_region
      %s85 = ssub.s32 64, 64
      %86 = vsyncadd [#allocation8], %s85
      %s88 = sshll.u32 [#allocation9], 4
      %s89 = int_to_ptr.vmem [resolvable:$true] %s88
      %91 = dma.hbm_to_vmem [thread:$0]  %s9, 64, %s89, [#allocation8]
    $region41: #{decoder_forward.1} parent=1 // pred_fallthru
      _
    // Predicated region
    $region42: #{decoder_forward.1} parent=1 // pred_check
      _
    $region43: #{decoder_forward.1} parent=1 // pred_check_branch
      %93 = sbr.rel (0) target = $region45
    $region44: #{decoder_forward.1} parent=1 // pred_region
      %s95 = ssub.s32 1024, 1024
      %96 = vsyncadd [#allocation11], %s95
      %s97 = sshll.u32 [#allocation10], 4
      %s98 = int_to_ptr.vmem [resolvable:$true] %s97
      %103 = dma.hbm_to_vmem [thread:$0]  %s10, 1024, %s98, [#allocation11], 64, 64, 4
    $region45: #{decoder_forward.1} parent=1 // pred_fallthru
      _
    // Predicated region
    $region46: #{decoder_forward.1} parent=1 // pred_check
      _
    $region47: #{decoder_forward.1} parent=1 // pred_check_branch
      %105 = sbr.rel (0) target = $region49
    $region48: #{decoder_forward.1} parent=1 // pred_region
      _
    $region49: #{decoder_forward.1} parent=1 // pred_fallthru
      _
    // Predicated region
    $region50: #{decoder_forward.1} parent=1 // pred_check
      _
    $region51: #{decoder_forward.1} parent=1 // pred_check_branch
      %107 = sbr.rel (0) target = $region53
    $region52: #{decoder_forward.1} parent=1 // pred_region
      %108 = dma.done [#allocation3], 4096
    $region53: #{decoder_forward.1} parent=1 // pred_fallthru
      _
    // Predicated region
    $region54: #{decoder_forward.1} parent=1 // pred_check
      _
    $region55: #{decoder_forward.1} parent=1 // pred_check_branch
      %110 = sbr.rel (0) target = $region57
    $region56: #{decoder_forward.1} parent=1 // pred_region
      %111 = dma.done [#allocation5], 4096
    $region57: #{decoder_forward.1} parent=1 // pred_fallthru
      _
    // Predicated region
    $region58: #{decoder_forward.1} parent=1 // pred_check
      _
    $region59: #{decoder_forward.1} parent=1 // pred_check_branch
      %113 = sbr.rel (0) target = $region61
    $region60: #{decoder_forward.1} parent=1 // pred_region
      %114 = dma.done [#allocation5], 4096
    $region61: #{decoder_forward.1} parent=1 // pred_fallthru
      _
    // Predicated region
    $region62: #{decoder_forward.1} parent=1 // pred_check
      _
    $region63: #{decoder_forward.1} parent=1 // pred_check_branch
      %116 = sbr.rel (0) target = $region65
    $region64: #{decoder_forward.1} parent=1 // pred_region
      %117 = dma.done [#allocation8], 4096
    $region65: #{decoder_forward.1} parent=1 // pred_fallthru
      _
    // Predicated region
    $region66: #{decoder_forward.1} parent=1 // pred_check
      _
    $region67: #{decoder_forward.1} parent=1 // pred_check_branch
      %119 = sbr.rel (0) target = $region69
    $region68: #{decoder_forward.1} parent=1 // pred_region
      %120 = dma.done [#allocation8], 64
    $region69: #{decoder_forward.1} parent=1 // pred_fallthru
      _
    // Predicated region
    $region70: #{decoder_forward.1} parent=1 // pred_check
      _
    $region71: #{decoder_forward.1} parent=1 // pred_check_branch
      %122 = sbr.rel (0) target = $region73
    $region72: #{decoder_forward.1} parent=1 // pred_region
      %123 = dma.done [#allocation11], 1024
    $region73: #{decoder_forward.1} parent=1 // pred_fallthru
      _
    %v125 = vlaneseq
    %v126 = vand.u32 %v125, 127
    %v127 = vld [vmem:[%s0] sm:$0xff]
    %128 = vset.pattern.permute.xlu0 0
    %129 = vperm.xlu0 %128, %v127
    %v130 = vpop.permute.xlu0 %129
    %vm131 = vcmp.eq.s32.totalorder %v126, %v130
    %v132 = vsel %vm131, 1, 0
    %v133 = vcvt.s32.f32 %v132
    %v134 = vpack.c.bf16 %v133, %v133
    %v135 = vld [vmem:[%s3] sm:$0xf]
    %v136 = vld [vmem:[%s3 + $0x4] sm:$0xf]
    %v137 = vld [vmem:[%s3 + $0x8] sm:$0xf]
    %v138 = vld [vmem:[%s3 + $0xc] sm:$0xf]
    %v139 = vld [vmem:[%s3 + $0x10] sm:$0xf]
    %v140 = vld [vmem:[%s3 + $0x14] sm:$0xf]
    %v141 = vld [vmem:[%s3 + $0x18] sm:$0xf]
    %v142 = vld [vmem:[%s3 + $0x1c] sm:$0xf]
    %v143 = vld [vmem:[%s3 + $0x20] sm:$0xf]
    %v144 = vld [vmem:[%s3 + $0x24] sm:$0xf]
    %v145 = vld [vmem:[%s3 + $0x28] sm:$0xf]
    %v146 = vld [vmem:[%s3 + $0x2c] sm:$0xf]
    %v147 = vld [vmem:[%s3 + $0x30] sm:$0xf]
    %v148 = vld [vmem:[%s3 + $0x34] sm:$0xf]
    %v149 = vld [vmem:[%s3 + $0x38] sm:$0xf]
    %v150 = vld [vmem:[%s3 + $0x3c] sm:$0xf]
    %v167 = vunpack.c.l.b16 %v135
    %v168 = vunpack.c.l.b16 %v136
    %v169 = vunpack.c.l.b16 %v137
    %v170 = vunpack.c.l.b16 %v138
    %v171 = vunpack.c.l.b16 %v139
    %v172 = vunpack.c.l.b16 %v140
    %v173 = vunpack.c.l.b16 %v141
    %v174 = vunpack.c.l.b16 %v142
    %v175 = vunpack.c.l.b16 %v143
    %v176 = vunpack.c.l.b16 %v144
    %v177 = vunpack.c.l.b16 %v145
    %v178 = vunpack.c.l.b16 %v146
    %v179 = vunpack.c.l.b16 %v147
    %v180 = vunpack.c.l.b16 %v148
    %v181 = vunpack.c.l.b16 %v149
    %v182 = vunpack.c.l.b16 %v150
    %v183 = vpack.c.b16 %v168, %v167
    %v184 = vpack.c.b16 %v170, %v169
    %v185 = vpack.c.b16 %v172, %v171
    %v186 = vpack.c.b16 %v174, %v173
    %v187 = vpack.c.b16 %v176, %v175
    %v188 = vpack.c.b16 %v178, %v177
    %v189 = vpack.c.b16 %v180, %v179
    %v190 = vpack.c.b16 %v182, %v181
    %199 = vmatprep.subr.bf16.mxu0 0
    %200 = vmatpush1.bf16.msra.mxu0 %v183
    %201 = vmatprep.subr.bf16.mxu0 0
    %202 = vmatpush1.bf16.msra.mxu0 %v184
    %203 = vmatprep.subr.bf16.mxu0 0
    %204 = vmatpush1.bf16.msra.mxu0 %v185
    %205 = vmatprep.subr.bf16.mxu0 0
    %206 = vmatpush1.bf16.msra.mxu0 %v186
    %207 = vmatprep.subr.bf16.mxu0 0
    %208 = vmatpush1.bf16.msra.mxu0 %v187
    %209 = vmatprep.subr.bf16.mxu0 0
    %210 = vmatpush1.bf16.msra.mxu0 %v188
    %211 = vmatprep.subr.bf16.mxu0 0
    %212 = vmatpush1.bf16.msra.mxu0 %v189
    %213 = vmatprep.subr.bf16.mxu0 0
    %214 = vmatpush1.bf16.msra.mxu0 %v190
    %215 = vmatprep.subr.bf16.mxu0 0
    %216 = vmatpush1.bf16.msra.mxu0 0
    %217 = vmatprep.subr.bf16.mxu0 0
    %218 = vmatpush1.bf16.msra.mxu0 0
    %219 = vmatprep.subr.bf16.mxu0 0
    %220 = vmatpush1.bf16.msra.mxu0 0
    %221 = vmatprep.subr.bf16.mxu0 0
    %222 = vmatpush1.bf16.msra.mxu0 0
    %223 = vmatprep.subr.bf16.mxu0 0
    %224 = vmatpush1.bf16.msra.mxu0 0
    %225 = vmatprep.subr.bf16.mxu0 0
    %226 = vmatpush1.bf16.msra.mxu0 0
    %227 = vmatprep.subr.bf16.mxu0 0
    %228 = vmatpush1.bf16.msra.mxu0 0
    %229 = vmatprep.subr.bf16.mxu0 0
    %230 = vmatpush1.bf16.msra.mxu0 0
    %231 = vmatprep.mubr.bf16.mxu0 0
    %232 = vmatmul.mubr.bf16.gmra.mrb[0].mxu0 %v134
    %v233 = vpop.f32.mrb[0].mxu0
    %v234 = vadd.f32 0.0, %v233
    %v235 = vpop.f32.mrb[0].mxu0
    %v236 = vpop.f32.mrb[0].mxu0
    %v237 = vpop.f32.mrb[0].mxu0
    %238 = vdwg.mxu0
    %v239 = vld [vmem:[%s1] sm:$0xff]
    %v240 = vld [vmem:[%s2] sm:$0xff]
    %v241 = vpack.c.bf16 %v234, %v234
    %v242 = vld [vmem:[#allocation2] sm:$0xff]
    %v243 = vld [vmem:[#allocation2 + $0x8] sm:$0xff]
    %v244 = vld [vmem:[#allocation2 + $0x10] sm:$0xff]
    %v245 = vld [vmem:[#allocation2 + $0x18] sm:$0xff]
    %v246 = vld [vmem:[#allocation2 + $0x20] sm:$0xff]
    %v247 = vld [vmem:[#allocation2 + $0x28] sm:$0xff]
    %v248 = vld [vmem:[#allocation2 + $0x30] sm:$0xff]
    %v249 = vld [vmem:[#allocation2 + $0x38] sm:$0xff]
    %v250 = vld [vmem:[#allocation2 + $0x40] sm:$0xff]
    %v251 = vld [vmem:[#allocation2 + $0x48] sm:$0xff]
    %v252 = vld [vmem:[#allocation2 + $0x50] sm:$0xff]
    %v253 = vld [vmem:[#allocation2 + $0x58] sm:$0xff]
    %v254 = vld [vmem:[#allocation2 + $0x60] sm:$0xff]
    %v255 = vld [vmem:[#allocation2 + $0x68] sm:$0xff]
    %v256 = vld [vmem:[#allocation2 + $0x70] sm:$0xff]
    %v257 = vld [vmem:[#allocation2 + $0x78] sm:$0xff]
    %v258 = vld [vmem:[#allocation2 + $0x80] sm:$0xff]
    %v259 = vld [vmem:[#allocation2 + $0x88] sm:$0xff]
    %v260 = vld [vmem:[#allocation2 + $0x90] sm:$0xff]
    %v261 = vld [vmem:[#allocation2 + $0x98] sm:$0xff]
    %v262 = vld [vmem:[#allocation2 + $0xa0] sm:$0xff]
    %v263 = vld [vmem:[#allocation2 + $0xa8] sm:$0xff]
    %v264 = vld [vmem:[#allocation2 + $0xb0] sm:$0xff]
    %v265 = vld [vmem:[#allocation2 + $0xb8] sm:$0xff]
    %v266 = vld [vmem:[#allocation2 + $0xc0] sm:$0xff]
    %v267 = vld [vmem:[#allocation2 + $0xc8] sm:$0xff]
    %v268 = vld [vmem:[#allocation2 + $0xd0] sm:$0xff]
    %v269 = vld [vmem:[#allocation2 + $0xd8] sm:$0xff]
    %v270 = vld [vmem:[#allocation2 + $0xe0] sm:$0xff]
    %v271 = vld [vmem:[#allocation2 + $0xe8] sm:$0xff]
    %v272 = vld [vmem:[#allocation2 + $0xf0] sm:$0xff]
    %v273 = vld [vmem:[#allocation2 + $0xf8] sm:$0xff]
    %v274 = vpack.c.bf16 %v239, %v239
    %v275 = vld [vmem:[#allocation6] sm:$0xff]
    %v276 = vld [vmem:[#allocation6 + $0x8] sm:$0xff]
    %v277 = vld [vmem:[#allocation6 + $0x10] sm:$0xff]
    %v278 = vld [vmem:[#allocation6 + $0x18] sm:$0xff]
    %v279 = vld [vmem:[#allocation6 + $0x20] sm:$0xff]
    %v280 = vld [vmem:[#allocation6 + $0x28] sm:$0xff]
    %v281 = vld [vmem:[#allocation6 + $0x30] sm:$0xff]
    %v282 = vld [vmem:[#allocation6 + $0x38] sm:$0xff]
    %v283 = vld [vmem:[#allocation6 + $0x40] sm:$0xff]
    %v284 = vld [vmem:[#allocation6 + $0x48] sm:$0xff]
    %v285 = vld [vmem:[#allocation6 + $0x50] sm:$0xff]
    %v286 = vld [vmem:[#allocation6 + $0x58] sm:$0xff]
    %v287 = vld [vmem:[#allocation6 + $0x60] sm:$0xff]
    %v288 = vld [vmem:[#allocation6 + $0x68] sm:$0xff]
    %v289 = vld [vmem:[#allocation6 + $0x70] sm:$0xff]
    %v290 = vld [vmem:[#allocation6 + $0x78] sm:$0xff]
    %v291 = vld [vmem:[#allocation6 + $0x80] sm:$0xff]
    %v292 = vld [vmem:[#allocation6 + $0x88] sm:$0xff]
    %v293 = vld [vmem:[#allocation6 + $0x90] sm:$0xff]
    %v294 = vld [vmem:[#allocation6 + $0x98] sm:$0xff]
    %v295 = vld [vmem:[#allocation6 + $0xa0] sm:$0xff]
    %v296 = vld [vmem:[#allocation6 + $0xa8] sm:$0xff]
    %v297 = vld [vmem:[#allocation6 + $0xb0] sm:$0xff]
    %v298 = vld [vmem:[#allocation6 + $0xb8] sm:$0xff]
    %v299 = vld [vmem:[#allocation6 + $0xc0] sm:$0xff]
    %v300 = vld [vmem:[#allocation6 + $0xc8] sm:$0xff]
    %v301 = vld [vmem:[#allocation6 + $0xd0] sm:$0xff]
    %v302 = vld [vmem:[#allocation6 + $0xd8] sm:$0xff]
    %v303 = vld [vmem:[#allocation6 + $0xe0] sm:$0xff]
    %v304 = vld [vmem:[#allocation6 + $0xe8] sm:$0xff]
    %v305 = vld [vmem:[#allocation6 + $0xf0] sm:$0xff]
    %v306 = vld [vmem:[#allocation6 + $0xf8] sm:$0xff]
    %v339 = vunpack.c.l.b16 %v275
    %v340 = vunpack.c.h.b16 %v275
    %v341 = vunpack.c.l.b16 %v276
    %v342 = vunpack.c.h.b16 %v276
    %v343 = vunpack.c.l.b16 %v277
    %v344 = vunpack.c.h.b16 %v277
    %v345 = vunpack.c.l.b16 %v278
    %v346 = vunpack.c.h.b16 %v278
    %v347 = vunpack.c.l.b16 %v279
    %v348 = vunpack.c.h.b16 %v279
    %v349 = vunpack.c.l.b16 %v280
    %v350 = vunpack.c.h.b16 %v280
    %v351 = vunpack.c.l.b16 %v281
    %v352 = vunpack.c.h.b16 %v281
    %v353 = vunpack.c.l.b16 %v282
    %v354 = vunpack.c.h.b16 %v282
    %v355 = vunpack.c.l.b16 %v283
    %v356 = vunpack.c.h.b16 %v283
    %v357 = vunpack.c.l.b16 %v284
    %v358 = vunpack.c.h.b16 %v284
    %v359 = vunpack.c.l.b16 %v285
    %v360 = vunpack.c.h.b16 %v285
    %v361 = vunpack.c.l.b16 %v286
    %v362 = vunpack.c.h.b16 %v286
    %v363 = vunpack.c.l.b16 %v287
    %v364 = vunpack.c.h.b16 %v287
    %v365 = vunpack.c.l.b16 %v288
    %v366 = vunpack.c.h.b16 %v288
    %v367 = vunpack.c.l.b16 %v289
    %v368 = vunpack.c.h.b16 %v289
    %v369 = vunpack.c.l.b16 %v290
    %v370 = vunpack.c.h.b16 %v290
    %v371 = vunpack.c.l.b16 %v291
    %v372 = vunpack.c.h.b16 %v291
    %v373 = vunpack.c.l.b16 %v292
    %v374 = vunpack.c.h.b16 %v292
    %v375 = vunpack.c.l.b16 %v293
    %v376 = vunpack.c.h.b16 %v293
    %v377 = vunpack.c.l.b16 %v294
    %v378 = vunpack.c.h.b16 %v294
    %v379 = vunpack.c.l.b16 %v295
    %v380 = vunpack.c.h.b16 %v295
    %v381 = vunpack.c.l.b16 %v296
    %v382 = vunpack.c.h.b16 %v296
    %v383 = vunpack.c.l.b16 %v297
    %v384 = vunpack.c.h.b16 %v297
    %v385 = vunpack.c.l.b16 %v298
    %v386 = vunpack.c.h.b16 %v298
    %v387 = vunpack.c.l.b16 %v299
    %v388 = vunpack.c.h.b16 %v299
    %v389 = vunpack.c.l.b16 %v300
    %v390 = vunpack.c.h.b16 %v300
    %v391 = vunpack.c.l.b16 %v301
    %v392 = vunpack.c.h.b16 %v301
    %v393 = vunpack.c.l.b16 %v302
    %v394 = vunpack.c.h.b16 %v302
    %v395 = vunpack.c.l.b16 %v303
    %v396 = vunpack.c.h.b16 %v303
    %v397 = vunpack.c.l.b16 %v304
    %v398 = vunpack.c.h.b16 %v304
    %v399 = vunpack.c.l.b16 %v305
    %v400 = vunpack.c.h.b16 %v305
    %v401 = vunpack.c.l.b16 %v306
    %v402 = vunpack.c.h.b16 %v306
    %v403 = vpack.c.b16 %v343, %v339
    %v404 = vpack.c.b16 %v344, %v340
    %v405 = vpack.c.b16 %v345, %v341
    %v406 = vpack.c.b16 %v346, %v342
    %v407 = vpack.c.b16 %v351, %v347
    %v408 = vpack.c.b16 %v352, %v348
    %v409 = vpack.c.b16 %v353, %v349
    %v410 = vpack.c.b16 %v354, %v350
    %v411 = vpack.c.b16 %v359, %v355
    %v412 = vpack.c.b16 %v360, %v356
    %v413 = vpack.c.b16 %v361, %v357
    %v414 = vpack.c.b16 %v362, %v358
    %v415 = vpack.c.b16 %v367, %v363
    %v416 = vpack.c.b16 %v368, %v364
    %v417 = vpack.c.b16 %v369, %v365
    %v418 = vpack.c.b16 %v370, %v366
    %v419 = vpack.c.b16 %v375, %v371
    %v420 = vpack.c.b16 %v376, %v372
    %v421 = vpack.c.b16 %v377, %v373
    %v422 = vpack.c.b16 %v378, %v374
    %v423 = vpack.c.b16 %v383, %v379
    %v424 = vpack.c.b16 %v384, %v380
    %v425 = vpack.c.b16 %v385, %v381
    %v426 = vpack.c.b16 %v386, %v382
    %v427 = vpack.c.b16 %v391, %v387
    %v428 = vpack.c.b16 %v392, %v388
    %v429 = vpack.c.b16 %v393, %v389
    %v430 = vpack.c.b16 %v394, %v390
    %v431 = vpack.c.b16 %v399, %v395
    %v432 = vpack.c.b16 %v400, %v396
    %v433 = vpack.c.b16 %v401, %v397
    %v434 = vpack.c.b16 %v402, %v398
    %467 = vmatprep.subr.bf16.mxu0 %v404
    %468 = vmatpush1.bf16.msra.mxu0 %v403
    %469 = vmatprep.subr.bf16.mxu0 %v408
    %470 = vmatpush1.bf16.msra.mxu0 %v407
    %471 = vmatprep.subr.bf16.mxu0 %v412
    %472 = vmatpush1.bf16.msra.mxu0 %v411
    %473 = vmatprep.subr.bf16.mxu0 %v416
    %474 = vmatpush1.bf16.msra.mxu0 %v415
    %475 = vmatprep.subr.bf16.mxu0 %v420
    %476 = vmatpush1.bf16.msra.mxu0 %v419
    %477 = vmatprep.subr.bf16.mxu0 %v424
    %478 = vmatpush1.bf16.msra.mxu0 %v423
    %479 = vmatprep.subr.bf16.mxu0 %v428
    %480 = vmatpush1.bf16.msra.mxu0 %v427
    %481 = vmatprep.subr.bf16.mxu0 %v432
    %482 = vmatpush1.bf16.msra.mxu0 %v431
    %483 = vmatprep.subr.bf16.mxu0 0
    %484 = vmatpush1.bf16.msra.mxu0 0
    %485 = vmatprep.subr.bf16.mxu0 0
    %486 = vmatpush1.bf16.msra.mxu0 0
    %487 = vmatprep.subr.bf16.mxu0 0
    %488 = vmatpush1.bf16.msra.mxu0 0
    %489 = vmatprep.subr.bf16.mxu0 0
    %490 = vmatpush1.bf16.msra.mxu0 0
    %491 = vmatprep.subr.bf16.mxu0 0
    %492 = vmatpush1.bf16.msra.mxu0 0
    %493 = vmatprep.subr.bf16.mxu0 0
    %494 = vmatpush1.bf16.msra.mxu0 0
    %495 = vmatprep.subr.bf16.mxu0 0
    %496 = vmatpush1.bf16.msra.mxu0 0
    %497 = vmatprep.subr.bf16.mxu0 0
    %498 = vmatpush1.bf16.msra.mxu0 0
    %499 = vmatprep.mubr.bf16.mxu0 0
    %500 = vmatmul.mubr.bf16.gmra.mrb[0].mxu0 %v274
    %v501 = vpop.f32.mrb[0].mxu0
    %v502 = vadd.f32 0.0, %v501
    %v503 = vpop.f32.mrb[0].mxu0
    %v504 = vadd.f32 0.0, %v503
    %v505 = vpop.f32.mrb[0].mxu0
    %v506 = vpop.f32.mrb[0].mxu0
    %507 = vdwg.mxu0
    %508 = vmatprep.subr.bf16.mxu0 %v406
    %509 = vmatpush1.bf16.msra.mxu0 %v405
    %510 = vmatprep.subr.bf16.mxu0 %v410
    %511 = vmatpush1.bf16.msra.mxu0 %v409
    %512 = vmatprep.subr.bf16.mxu0 %v414
    %513 = vmatpush1.bf16.msra.mxu0 %v413
    %514 = vmatprep.subr.bf16.mxu0 %v418
    %515 = vmatpush1.bf16.msra.mxu0 %v417
    %516 = vmatprep.subr.bf16.mxu0 %v422
    %517 = vmatpush1.bf16.msra.mxu0 %v421
    %518 = vmatprep.subr.bf16.mxu0 %v426
    %519 = vmatpush1.bf16.msra.mxu0 %v425
    %520 = vmatprep.subr.bf16.mxu0 %v430
    %521 = vmatpush1.bf16.msra.mxu0 %v429
    %522 = vmatprep.subr.bf16.mxu0 %v434
    %523 = vmatpush1.bf16.msra.mxu0 %v433
    %524 = vmatprep.subr.bf16.mxu0 0
    %525 = vmatpush1.bf16.msra.mxu0 0
    %526 = vmatprep.subr.bf16.mxu0 0
    %527 = vmatpush1.bf16.msra.mxu0 0
    %528 = vmatprep.subr.bf16.mxu0 0
    %529 = vmatpush1.bf16.msra.mxu0 0
    %530 = vmatprep.subr.bf16.mxu0 0
    %531 = vmatpush1.bf16.msra.mxu0 0
    %532 = vmatprep.subr.bf16.mxu0 0
    %533 = vmatpush1.bf16.msra.mxu0 0
    %534 = vmatprep.subr.bf16.mxu0 0
    %535 = vmatpush1.bf16.msra.mxu0 0
    %536 = vmatprep.subr.bf16.mxu0 0
    %537 = vmatpush1.bf16.msra.mxu0 0
    %538 = vmatprep.subr.bf16.mxu0 0
    %539 = vmatpush1.bf16.msra.mxu0 0
    %540 = vmatprep.mubr.bf16.mxu0 0
    %541 = vmatmul.mubr.bf16.gmra.mrb[0].mxu0 %v274
    %v542 = vpop.f32.mrb[0].mxu0
    %v543 = vadd.f32 0.0, %v542
    %v544 = vpop.f32.mrb[0].mxu0
    %v545 = vadd.f32 0.0, %v544
    %v546 = vpop.f32.mrb[0].mxu0
    %v547 = vpop.f32.mrb[0].mxu0
    %548 = vdwg.mxu0
    %v581 = vunpack.c.l.b16 %v242
    %v582 = vunpack.c.h.b16 %v242
    %v583 = vunpack.c.l.b16 %v243
    %v584 = vunpack.c.h.b16 %v243
    %v585 = vunpack.c.l.b16 %v244
    %v586 = vunpack.c.h.b16 %v244
    %v587 = vunpack.c.l.b16 %v245
    %v588 = vunpack.c.h.b16 %v245
    %v589 = vunpack.c.l.b16 %v246
    %v590 = vunpack.c.h.b16 %v246
    %v591 = vunpack.c.l.b16 %v247
    %v592 = vunpack.c.h.b16 %v247
    %v593 = vunpack.c.l.b16 %v248
    %v594 = vunpack.c.h.b16 %v248
    %v595 = vunpack.c.l.b16 %v249
    %v596 = vunpack.c.h.b16 %v249
    %v597 = vunpack.c.l.b16 %v250
    %v598 = vunpack.c.h.b16 %v250
    %v599 = vunpack.c.l.b16 %v251
    %v600 = vunpack.c.h.b16 %v251
    %v601 = vunpack.c.l.b16 %v252
    %v602 = vunpack.c.h.b16 %v252
    %v603 = vunpack.c.l.b16 %v253
    %v604 = vunpack.c.h.b16 %v253
    %v605 = vunpack.c.l.b16 %v254
    %v606 = vunpack.c.h.b16 %v254
    %v607 = vunpack.c.l.b16 %v255
    %v608 = vunpack.c.h.b16 %v255
    %v609 = vunpack.c.l.b16 %v256
    %v610 = vunpack.c.h.b16 %v256
    %v611 = vunpack.c.l.b16 %v257
    %v612 = vunpack.c.h.b16 %v257
    %v613 = vunpack.c.l.b16 %v258
    %v614 = vunpack.c.h.b16 %v258
    %v615 = vunpack.c.l.b16 %v259
    %v616 = vunpack.c.h.b16 %v259
    %v617 = vunpack.c.l.b16 %v260
    %v618 = vunpack.c.h.b16 %v260
    %v619 = vunpack.c.l.b16 %v261
    %v620 = vunpack.c.h.b16 %v261
    %v621 = vunpack.c.l.b16 %v262
    %v622 = vunpack.c.h.b16 %v262
    %v623 = vunpack.c.l.b16 %v263
    %v624 = vunpack.c.h.b16 %v263
    %v625 = vunpack.c.l.b16 %v264
    %v626 = vunpack.c.h.b16 %v264
    %v627 = vunpack.c.l.b16 %v265
    %v628 = vunpack.c.h.b16 %v265
    %v629 = vunpack.c.l.b16 %v266
    %v630 = vunpack.c.h.b16 %v266
    %v631 = vunpack.c.l.b16 %v267
    %v632 = vunpack.c.h.b16 %v267
    %v633 = vunpack.c.l.b16 %v268
    %v634 = vunpack.c.h.b16 %v268
    %v635 = vunpack.c.l.b16 %v269
    %v636 = vunpack.c.h.b16 %v269
    %v637 = vunpack.c.l.b16 %v270
    %v638 = vunpack.c.h.b16 %v270
    %v639 = vunpack.c.l.b16 %v271
    %v640 = vunpack.c.h.b16 %v271
    %v641 = vunpack.c.l.b16 %v272
    %v642 = vunpack.c.h.b16 %v272
    %v643 = vunpack.c.l.b16 %v273
    %v644 = vunpack.c.h.b16 %v273
    %v645 = vpack.c.b16 %v585, %v581
    %v646 = vpack.c.b16 %v586, %v582
    %v647 = vpack.c.b16 %v587, %v583
    %v648 = vpack.c.b16 %v588, %v584
    %v649 = vpack.c.b16 %v593, %v589
    %v650 = vpack.c.b16 %v594, %v590
    %v651 = vpack.c.b16 %v595, %v591
    %v652 = vpack.c.b16 %v596, %v592
    %v653 = vpack.c.b16 %v601, %v597
    %v654 = vpack.c.b16 %v602, %v598
    %v655 = vpack.c.b16 %v603, %v599
    %v656 = vpack.c.b16 %v604, %v600
    %v657 = vpack.c.b16 %v609, %v605
    %v658 = vpack.c.b16 %v610, %v606
    %v659 = vpack.c.b16 %v611, %v607
    %v660 = vpack.c.b16 %v612, %v608
    %v661 = vpack.c.b16 %v617, %v613
    %v662 = vpack.c.b16 %v618, %v614
    %v663 = vpack.c.b16 %v619, %v615
    %v664 = vpack.c.b16 %v620, %v616
    %v665 = vpack.c.b16 %v625, %v621
    %v666 = vpack.c.b16 %v626, %v622
    %v667 = vpack.c.b16 %v627, %v623
    %v668 = vpack.c.b16 %v628, %v624
    %v669 = vpack.c.b16 %v633, %v629
    %v670 = vpack.c.b16 %v634, %v630
    %v671 = vpack.c.b16 %v635, %v631
    %v672 = vpack.c.b16 %v636, %v632
    %v673 = vpack.c.b16 %v641, %v637
    %v674 = vpack.c.b16 %v642, %v638
    %v675 = vpack.c.b16 %v643, %v639
    %v676 = vpack.c.b16 %v644, %v640
    %709 = vmatprep.subr.bf16.mxu0 %v646
    %710 = vmatpush1.bf16.msra.mxu0 %v645
    %711 = vmatprep.subr.bf16.mxu0 %v650
    %712 = vmatpush1.bf16.msra.mxu0 %v649
    %713 = vmatprep.subr.bf16.mxu0 %v654
    %714 = vmatpush1.bf16.msra.mxu0 %v653
    %715 = vmatprep.subr.bf16.mxu0 %v658
    %716 = vmatpush1.bf16.msra.mxu0 %v657
    %717 = vmatprep.subr.bf16.mxu0 %v662
    %718 = vmatpush1.bf16.msra.mxu0 %v661
    %719 = vmatprep.subr.bf16.mxu0 %v666
    %720 = vmatpush1.bf16.msra.mxu0 %v665
    %721 = vmatprep.subr.bf16.mxu0 %v670
    %722 = vmatpush1.bf16.msra.mxu0 %v669
    %723 = vmatprep.subr.bf16.mxu0 %v674
    %724 = vmatpush1.bf16.msra.mxu0 %v673
    %725 = vmatprep.subr.bf16.mxu0 0
    %726 = vmatpush1.bf16.msra.mxu0 0
    %727 = vmatprep.subr.bf16.mxu0 0
    %728 = vmatpush1.bf16.msra.mxu0 0
    %729 = vmatprep.subr.bf16.mxu0 0
    %730 = vmatpush1.bf16.msra.mxu0 0
    %731 = vmatprep.subr.bf16.mxu0 0
    %732 = vmatpush1.bf16.msra.mxu0 0
    %733 = vmatprep.subr.bf16.mxu0 0
    %734 = vmatpush1.bf16.msra.mxu0 0
    %735 = vmatprep.subr.bf16.mxu0 0
    %736 = vmatpush1.bf16.msra.mxu0 0
    %737 = vmatprep.subr.bf16.mxu0 0
    %738 = vmatpush1.bf16.msra.mxu0 0
    %739 = vmatprep.subr.bf16.mxu0 0
    %740 = vmatpush1.bf16.msra.mxu0 0
    %741 = vmatprep.mubr.bf16.mxu0 0
    %742 = vmatmul.mubr.bf16.gmra.mrb[0].mxu0 %v241
    %v743 = vpop.f32.mrb[0].mxu0
    %v744 = vadd.f32 %v502, %v743
    %v745 = vpop.f32.mrb[0].mxu0
    %v746 = vadd.f32 %v504, %v745
    %v747 = vpop.f32.mrb[0].mxu0
    %v748 = vpop.f32.mrb[0].mxu0
    %749 = vdwg.mxu0
    %750 = vmatprep.subr.bf16.mxu0 %v648
    %751 = vmatpush1.bf16.msra.mxu0 %v647
    %752 = vmatprep.subr.bf16.mxu0 %v652
    %753 = vmatpush1.bf16.msra.mxu0 %v651
    %754 = vmatprep.subr.bf16.mxu0 %v656
    %755 = vmatpush1.bf16.msra.mxu0 %v655
    %756 = vmatprep.subr.bf16.mxu0 %v660
    %757 = vmatpush1.bf16.msra.mxu0 %v659
    %758 = vmatprep.subr.bf16.mxu0 %v664
    %759 = vmatpush1.bf16.msra.mxu0 %v663
    %760 = vmatprep.subr.bf16.mxu0 %v668
    %761 = vmatpush1.bf16.msra.mxu0 %v667
    %762 = vmatprep.subr.bf16.mxu0 %v672
    %763 = vmatpush1.bf16.msra.mxu0 %v671
    %764 = vmatprep.subr.bf16.mxu0 %v676
    %765 = vmatpush1.bf16.msra.mxu0 %v675
    %766 = vmatprep.subr.bf16.mxu0 0
    %767 = vmatpush1.bf16.msra.mxu0 0
    %768 = vmatprep.subr.bf16.mxu0 0
    %769 = vmatpush1.bf16.msra.mxu0 0
    %770 = vmatprep.subr.bf16.mxu0 0
    %771 = vmatpush1.bf16.msra.mxu0 0
    %772 = vmatprep.subr.bf16.mxu0 0
    %773 = vmatpush1.bf16.msra.mxu0 0
    %774 = vmatprep.subr.bf16.mxu0 0
    %775 = vmatpush1.bf16.msra.mxu0 0
    %776 = vmatprep.subr.bf16.mxu0 0
    %777 = vmatpush1.bf16.msra.mxu0 0
    %778 = vmatprep.subr.bf16.mxu0 0
    %779 = vmatpush1.bf16.msra.mxu0 0
    %780 = vmatprep.subr.bf16.mxu0 0
    %781 = vmatpush1.bf16.msra.mxu0 0
    %782 = vmatprep.mubr.bf16.mxu0 0
    %783 = vmatmul.mubr.bf16.gmra.mrb[0].mxu0 %v241
    %v784 = vpop.f32.mrb[0].mxu0
    %v785 = vadd.f32 %v543, %v784
    %v786 = vpop.f32.mrb[0].mxu0
    %v787 = vadd.f32 %v545, %v786
    %v788 = vpop.f32.mrb[0].mxu0
    %v789 = vpop.f32.mrb[0].mxu0
    %790 = vdwg.mxu0
    %v791 = vld [vmem:[%s8] sm:$0xf]
    %v793 = vlaneseq
    %v794 = vshrl.u32 %v793, 7
    %v795 = vsub.s32 0, %v794
    %v796 = vrot.slane %v791, %v795
    %v797 = vlaneseq
    %v798 = vshrl.u32 %v797, 7
    %v799 = vsub.s32 1, %v798
    %v800 = vrot.slane %v791, %v799
    %v801 = vlaneseq
    %v802 = vshrl.u32 %v801, 7
    %v803 = vsub.s32 2, %v802
    %v804 = vrot.slane %v791, %v803
    %v805 = vlaneseq
    %v806 = vshrl.u32 %v805, 7
    %v807 = vsub.s32 3, %v806
    %v808 = vrot.slane %v791, %v807
    %v813 = vadd.f32 %v744, %v796
    %v814 = vadd.f32 %v746, %v800
    %v815 = vadd.f32 %v785, %v804
    %v816 = vadd.f32 %v787, %v808
    %v817 = vxor.u32 %v813, 2147483648
    %v818 = vmul.f32 %v817, 1.442695
    %v819 = vpow.pop %v818
    %v820 = vadd.f32 %v819, 1.0
    %v821 = vrcp.pop %v820
    %v822 = vmul.f32 1.0, %v821
    %v823 = vxor.u32 %v814, 2147483648
    %v824 = vmul.f32 %v823, 1.442695
    %v825 = vpow.pop %v824
    %v826 = vadd.f32 %v825, 1.0
    %v827 = vrcp.pop %v826
    %v828 = vmul.f32 1.0, %v827
    %v829 = vtanh.pop %v815
    %v830 = vxor.u32 %v816, 2147483648
    %v831 = vmul.f32 %v830, 1.442695
    %v832 = vpow.pop %v831
    %v833 = vadd.f32 %v832, 1.0
    %v834 = vrcp.pop %v833
    %v835 = vmul.f32 1.0, %v834
    %v836 = vmul.f32 %v828, %v240
    %v837 = vmul.f32 %v822, %v829
    %v838 = vadd.f32 %v836, %v837
    %v839 = vtanh.pop %v838
    %v840 = vmul.f32 %v835, %v839
    %841 = vst [vmem:[%s13] sm:$0xff] %v840
    %842 = vst [vmem:[%s14] sm:$0xff] %v838
    %s843 = scalar_lea.vmem %s1, 8
    %v844 = vld [vmem:[%s843] sm:$0xff]
    %s845 = scalar_lea.vmem %s2, 8
    %v846 = vld [vmem:[%s845] sm:$0xff]
    %v847 = vpack.c.bf16 %v840, %v840
    %v848 = vld [vmem:[#allocation4] sm:$0xff]
    %v849 = vld [vmem:[#allocation4 + $0x8] sm:$0xff]
    %v850 = vld [vmem:[#allocation4 + $0x10] sm:$0xff]
    %v851 = vld [vmem:[#allocation4 + $0x18] sm:$0xff]
    %v852 = vld [vmem:[#allocation4 + $0x20] sm:$0xff]
    %v853 = vld [vmem:[#allocation4 + $0x28] sm:$0xff]
    %v854 = vld [vmem:[#allocation4 + $0x30] sm:$0xff]
    %v855 = vld [vmem:[#allocation4 + $0x38] sm:$0xff]
    %v856 = vld [vmem:[#allocation4 + $0x40] sm:$0xff]
    %v857 = vld [vmem:[#allocation4 + $0x48] sm:$0xff]
    %v858 = vld [vmem:[#allocation4 + $0x50] sm:$0xff]
    %v859 = vld [vmem:[#allocation4 + $0x58] sm:$0xff]
    %v860 = vld [vmem:[#allocation4 + $0x60] sm:$0xff]
    %v861 = vld [vmem:[#allocation4 + $0x68] sm:$0xff]
    %v862 = vld [vmem:[#allocation4 + $0x70] sm:$0xff]
    %v863 = vld [vmem:[#allocation4 + $0x78] sm:$0xff]
    %v864 = vld [vmem:[#allocation4 + $0x80] sm:$0xff]
    %v865 = vld [vmem:[#allocation4 + $0x88] sm:$0xff]
    %v866 = vld [vmem:[#allocation4 + $0x90] sm:$0xff]
    %v867 = vld [vmem:[#allocation4 + $0x98] sm:$0xff]
    %v868 = vld [vmem:[#allocation4 + $0xa0] sm:$0xff]
    %v869 = vld [vmem:[#allocation4 + $0xa8] sm:$0xff]
    %v870 = vld [vmem:[#allocation4 + $0xb0] sm:$0xff]
    %v871 = vld [vmem:[#allocation4 + $0xb8] sm:$0xff]
    %v872 = vld [vmem:[#allocation4 + $0xc0] sm:$0xff]
    %v873 = vld [vmem:[#allocation4 + $0xc8] sm:$0xff]
    %v874 = vld [vmem:[#allocation4 + $0xd0] sm:$0xff]
    %v875 = vld [vmem:[#allocation4 + $0xd8] sm:$0xff]
    %v876 = vld [vmem:[#allocation4 + $0xe0] sm:$0xff]
    %v877 = vld [vmem:[#allocation4 + $0xe8] sm:$0xff]
    %v878 = vld [vmem:[#allocation4 + $0xf0] sm:$0xff]
    %v879 = vld [vmem:[#allocation4 + $0xf8] sm:$0xff]
    %v880 = vpack.c.bf16 %v844, %v844
    %v881 = vld [vmem:[#allocation7] sm:$0xff]
    %v882 = vld [vmem:[#allocation7 + $0x8] sm:$0xff]
    %v883 = vld [vmem:[#allocation7 + $0x10] sm:$0xff]
    %v884 = vld [vmem:[#allocation7 + $0x18] sm:$0xff]
    %v885 = vld [vmem:[#allocation7 + $0x20] sm:$0xff]
    %v886 = vld [vmem:[#allocation7 + $0x28] sm:$0xff]
    %v887 = vld [vmem:[#allocation7 + $0x30] sm:$0xff]
    %v888 = vld [vmem:[#allocation7 + $0x38] sm:$0xff]
    %v889 = vld [vmem:[#allocation7 + $0x40] sm:$0xff]
    %v890 = vld [vmem:[#allocation7 + $0x48] sm:$0xff]
    %v891 = vld [vmem:[#allocation7 + $0x50] sm:$0xff]
    %v892 = vld [vmem:[#allocation7 + $0x58] sm:$0xff]
    %v893 = vld [vmem:[#allocation7 + $0x60] sm:$0xff]
    %v894 = vld [vmem:[#allocation7 + $0x68] sm:$0xff]
    %v895 = vld [vmem:[#allocation7 + $0x70] sm:$0xff]
    %v896 = vld [vmem:[#allocation7 + $0x78] sm:$0xff]
    %v897 = vld [vmem:[#allocation7 + $0x80] sm:$0xff]
    %v898 = vld [vmem:[#allocation7 + $0x88] sm:$0xff]
    %v899 = vld [vmem:[#allocation7 + $0x90] sm:$0xff]
    %v900 = vld [vmem:[#allocation7 + $0x98] sm:$0xff]
    %v901 = vld [vmem:[#allocation7 + $0xa0] sm:$0xff]
    %v902 = vld [vmem:[#allocation7 + $0xa8] sm:$0xff]
    %v903 = vld [vmem:[#allocation7 + $0xb0] sm:$0xff]
    %v904 = vld [vmem:[#allocation7 + $0xb8] sm:$0xff]
    %v905 = vld [vmem:[#allocation7 + $0xc0] sm:$0xff]
    %v906 = vld [vmem:[#allocation7 + $0xc8] sm:$0xff]
    %v907 = vld [vmem:[#allocation7 + $0xd0] sm:$0xff]
    %v908 = vld [vmem:[#allocation7 + $0xd8] sm:$0xff]
    %v909 = vld [vmem:[#allocation7 + $0xe0] sm:$0xff]
    %v910 = vld [vmem:[#allocation7 + $0xe8] sm:$0xff]
    %v911 = vld [vmem:[#allocation7 + $0xf0] sm:$0xff]
    %v912 = vld [vmem:[#allocation7 + $0xf8] sm:$0xff]
    %v945 = vunpack.c.l.b16 %v881
    %v946 = vunpack.c.h.b16 %v881
    %v947 = vunpack.c.l.b16 %v882
    %v948 = vunpack.c.h.b16 %v882
    %v949 = vunpack.c.l.b16 %v883
    %v950 = vunpack.c.h.b16 %v883
    %v951 = vunpack.c.l.b16 %v884
    %v952 = vunpack.c.h.b16 %v884
    %v953 = vunpack.c.l.b16 %v885
    %v954 = vunpack.c.h.b16 %v885
    %v955 = vunpack.c.l.b16 %v886
    %v956 = vunpack.c.h.b16 %v886
    %v957 = vunpack.c.l.b16 %v887
    %v958 = vunpack.c.h.b16 %v887
    %v959 = vunpack.c.l.b16 %v888
    %v960 = vunpack.c.h.b16 %v888
    %v961 = vunpack.c.l.b16 %v889
    %v962 = vunpack.c.h.b16 %v889
    %v963 = vunpack.c.l.b16 %v890
    %v964 = vunpack.c.h.b16 %v890
    %v965 = vunpack.c.l.b16 %v891
    %v966 = vunpack.c.h.b16 %v891
    %v967 = vunpack.c.l.b16 %v892
    %v968 = vunpack.c.h.b16 %v892
    %v969 = vunpack.c.l.b16 %v893
    %v970 = vunpack.c.h.b16 %v893
    %v971 = vunpack.c.l.b16 %v894
    %v972 = vunpack.c.h.b16 %v894
    %v973 = vunpack.c.l.b16 %v895
    %v974 = vunpack.c.h.b16 %v895
    %v975 = vunpack.c.l.b16 %v896
    %v976 = vunpack.c.h.b16 %v896
    %v977 = vunpack.c.l.b16 %v897
    %v978 = vunpack.c.h.b16 %v897
    %v979 = vunpack.c.l.b16 %v898
    %v980 = vunpack.c.h.b16 %v898
    %v981 = vunpack.c.l.b16 %v899
    %v982 = vunpack.c.h.b16 %v899
    %v983 = vunpack.c.l.b16 %v900
    %v984 = vunpack.c.h.b16 %v900
    %v985 = vunpack.c.l.b16 %v901
    %v986 = vunpack.c.h.b16 %v901
    %v987 = vunpack.c.l.b16 %v902
    %v988 = vunpack.c.h.b16 %v902
    %v989 = vunpack.c.l.b16 %v903
    %v990 = vunpack.c.h.b16 %v903
    %v991 = vunpack.c.l.b16 %v904
    %v992 = vunpack.c.h.b16 %v904
    %v993 = vunpack.c.l.b16 %v905
    %v994 = vunpack.c.h.b16 %v905
    %v995 = vunpack.c.l.b16 %v906
    %v996 = vunpack.c.h.b16 %v906
    %v997 = vunpack.c.l.b16 %v907
    %v998 = vunpack.c.h.b16 %v907
    %v999 = vunpack.c.l.b16 %v908
    %v1000 = vunpack.c.h.b16 %v908
    %v1001 = vunpack.c.l.b16 %v909
    %v1002 = vunpack.c.h.b16 %v909
    %v1003 = vunpack.c.l.b16 %v910
    %v1004 = vunpack.c.h.b16 %v910
    %v1005 = vunpack.c.l.b16 %v911
    %v1006 = vunpack.c.h.b16 %v911
    %v1007 = vunpack.c.l.b16 %v912
    %v1008 = vunpack.c.h.b16 %v912
    %v1009 = vpack.c.b16 %v949, %v945
    %v1010 = vpack.c.b16 %v950, %v946
    %v1011 = vpack.c.b16 %v951, %v947
    %v1012 = vpack.c.b16 %v952, %v948
    %v1013 = vpack.c.b16 %v957, %v953
    %v1014 = vpack.c.b16 %v958, %v954
    %v1015 = vpack.c.b16 %v959, %v955
    %v1016 = vpack.c.b16 %v960, %v956
    %v1017 = vpack.c.b16 %v965, %v961
    %v1018 = vpack.c.b16 %v966, %v962
    %v1019 = vpack.c.b16 %v967, %v963
    %v1020 = vpack.c.b16 %v968, %v964
    %v1021 = vpack.c.b16 %v973, %v969
    %v1022 = vpack.c.b16 %v974, %v970
    %v1023 = vpack.c.b16 %v975, %v971
    %v1024 = vpack.c.b16 %v976, %v972
    %v1025 = vpack.c.b16 %v981, %v977
    %v1026 = vpack.c.b16 %v982, %v978
    %v1027 = vpack.c.b16 %v983, %v979
    %v1028 = vpack.c.b16 %v984, %v980
    %v1029 = vpack.c.b16 %v989, %v985
    %v1030 = vpack.c.b16 %v990, %v986
    %v1031 = vpack.c.b16 %v991, %v987
    %v1032 = vpack.c.b16 %v992, %v988
    %v1033 = vpack.c.b16 %v997, %v993
    %v1034 = vpack.c.b16 %v998, %v994
    %v1035 = vpack.c.b16 %v999, %v995
    %v1036 = vpack.c.b16 %v1000, %v996
    %v1037 = vpack.c.b16 %v1005, %v1001
    %v1038 = vpack.c.b16 %v1006, %v1002
    %v1039 = vpack.c.b16 %v1007, %v1003
    %v1040 = vpack.c.b16 %v1008, %v1004
    %1073 = vmatprep.subr.bf16.mxu0 %v1010
    %1074 = vmatpush1.bf16.msra.mxu0 %v1009
    %1075 = vmatprep.subr.bf16.mxu0 %v1014
    %1076 = vmatpush1.bf16.msra.mxu0 %v1013
    %1077 = vmatprep.subr.bf16.mxu0 %v1018
    %1078 = vmatpush1.bf16.msra.mxu0 %v1017
    %1079 = vmatprep.subr.bf16.mxu0 %v1022
    %1080 = vmatpush1.bf16.msra.mxu0 %v1021
    %1081 = vmatprep.subr.bf16.mxu0 %v1026
    %1082 = vmatpush1.bf16.msra.mxu0 %v1025
    %1083 = vmatprep.subr.bf16.mxu0 %v1030
    %1084 = vmatpush1.bf16.msra.mxu0 %v1029
    %1085 = vmatprep.subr.bf16.mxu0 %v1034
    %1086 = vmatpush1.bf16.msra.mxu0 %v1033
    %1087 = vmatprep.subr.bf16.mxu0 %v1038
    %1088 = vmatpush1.bf16.msra.mxu0 %v1037
    %1089 = vmatprep.subr.bf16.mxu0 0
    %1090 = vmatpush1.bf16.msra.mxu0 0
    %1091 = vmatprep.subr.bf16.mxu0 0
    %1092 = vmatpush1.bf16.msra.mxu0 0
    %1093 = vmatprep.subr.bf16.mxu0 0
    %1094 = vmatpush1.bf16.msra.mxu0 0
    %1095 = vmatprep.subr.bf16.mxu0 0
    %1096 = vmatpush1.bf16.msra.mxu0 0
    %1097 = vmatprep.subr.bf16.mxu0 0
    %1098 = vmatpush1.bf16.msra.mxu0 0
    %1099 = vmatprep.subr.bf16.mxu0 0
    %1100 = vmatpush1.bf16.msra.mxu0 0
    %1101 = vmatprep.subr.bf16.mxu0 0
    %1102 = vmatpush1.bf16.msra.mxu0 0
    %1103 = vmatprep.subr.bf16.mxu0 0
    %1104 = vmatpush1.bf16.msra.mxu0 0
    %1105 = vmatprep.mubr.bf16.mxu0 0
    %1106 = vmatmul.mubr.bf16.gmra.mrb[0].mxu0 %v880
    %v1107 = vpop.f32.mrb[0].mxu0
    %v1108 = vadd.f32 0.0, %v1107
    %v1109 = vpop.f32.mrb[0].mxu0
    %v1110 = vadd.f32 0.0, %v1109
    %v1111 = vpop.f32.mrb[0].mxu0
    %v1112 = vpop.f32.mrb[0].mxu0
    %1113 = vdwg.mxu0
    %1114 = vmatprep.subr.bf16.mxu0 %v1012
    %1115 = vmatpush1.bf16.msra.mxu0 %v1011
    %1116 = vmatprep.subr.bf16.mxu0 %v1016
    %1117 = vmatpush1.bf16.msra.mxu0 %v1015
    %1118 = vmatprep.subr.bf16.mxu0 %v1020
    %1119 = vmatpush1.bf16.msra.mxu0 %v1019
    %1120 = vmatprep.subr.bf16.mxu0 %v1024
    %1121 = vmatpush1.bf16.msra.mxu0 %v1023
    %1122 = vmatprep.subr.bf16.mxu0 %v1028
    %1123 = vmatpush1.bf16.msra.mxu0 %v1027
    %1124 = vmatprep.subr.bf16.mxu0 %v1032
    %1125 = vmatpush1.bf16.msra.mxu0 %v1031
    %1126 = vmatprep.subr.bf16.mxu0 %v1036
    %1127 = vmatpush1.bf16.msra.mxu0 %v1035
    %1128 = vmatprep.subr.bf16.mxu0 %v1040
    %1129 = vmatpush1.bf16.msra.mxu0 %v1039
    %1130 = vmatprep.subr.bf16.mxu0 0
    %1131 = vmatpush1.bf16.msra.mxu0 0
    %1132 = vmatprep.subr.bf16.mxu0 0
    %1133 = vmatpush1.bf16.msra.mxu0 0
    %1134 = vmatprep.subr.bf16.mxu0 0
    %1135 = vmatpush1.bf16.msra.mxu0 0
    %1136 = vmatprep.subr.bf16.mxu0 0
    %1137 = vmatpush1.bf16.msra.mxu0 0
    %1138 = vmatprep.subr.bf16.mxu0 0
    %1139 = vmatpush1.bf16.msra.mxu0 0
    %1140 = vmatprep.subr.bf16.mxu0 0
    %1141 = vmatpush1.bf16.msra.mxu0 0
    %1142 = vmatprep.subr.bf16.mxu0 0
    %1143 = vmatpush1.bf16.msra.mxu0 0
    %1144 = vmatprep.subr.bf16.mxu0 0
    %1145 = vmatpush1.bf16.msra.mxu0 0
    %1146 = vmatprep.mubr.bf16.mxu0 0
    %1147 = vmatmul.mubr.bf16.gmra.mrb[0].mxu0 %v880
    %v1148 = vpop.f32.mrb[0].mxu0
    %v1149 = vadd.f32 0.0, %v1148
    %v1150 = vpop.f32.mrb[0].mxu0
    %v1151 = vadd.f32 0.0, %v1150
    %v1152 = vpop.f32.mrb[0].mxu0
    %v1153 = vpop.f32.mrb[0].mxu0
    %1154 = vdwg.mxu0
    %v1187 = vunpack.c.l.b16 %v848
    %v1188 = vunpack.c.h.b16 %v848
    %v1189 = vunpack.c.l.b16 %v849
    %v1190 = vunpack.c.h.b16 %v849
    %v1191 = vunpack.c.l.b16 %v850
    %v1192 = vunpack.c.h.b16 %v850
    %v1193 = vunpack.c.l.b16 %v851
    %v1194 = vunpack.c.h.b16 %v851
    %v1195 = vunpack.c.l.b16 %v852
    %v1196 = vunpack.c.h.b16 %v852
    %v1197 = vunpack.c.l.b16 %v853
    %v1198 = vunpack.c.h.b16 %v853
    %v1199 = vunpack.c.l.b16 %v854
    %v1200 = vunpack.c.h.b16 %v854
    %v1201 = vunpack.c.l.b16 %v855
    %v1202 = vunpack.c.h.b16 %v855
    %v1203 = vunpack.c.l.b16 %v856
    %v1204 = vunpack.c.h.b16 %v856
    %v1205 = vunpack.c.l.b16 %v857
    %v1206 = vunpack.c.h.b16 %v857
    %v1207 = vunpack.c.l.b16 %v858
    %v1208 = vunpack.c.h.b16 %v858
    %v1209 = vunpack.c.l.b16 %v859
    %v1210 = vunpack.c.h.b16 %v859
    %v1211 = vunpack.c.l.b16 %v860
    %v1212 = vunpack.c.h.b16 %v860
    %v1213 = vunpack.c.l.b16 %v861
    %v1214 = vunpack.c.h.b16 %v861
    %v1215 = vunpack.c.l.b16 %v862
    %v1216 = vunpack.c.h.b16 %v862
    %v1217 = vunpack.c.l.b16 %v863
    %v1218 = vunpack.c.h.b16 %v863
    %v1219 = vunpack.c.l.b16 %v864
    %v1220 = vunpack.c.h.b16 %v864
    %v1221 = vunpack.c.l.b16 %v865
    %v1222 = vunpack.c.h.b16 %v865
    %v1223 = vunpack.c.l.b16 %v866
    %v1224 = vunpack.c.h.b16 %v866
    %v1225 = vunpack.c.l.b16 %v867
    %v1226 = vunpack.c.h.b16 %v867
    %v1227 = vunpack.c.l.b16 %v868
    %v1228 = vunpack.c.h.b16 %v868
    %v1229 = vunpack.c.l.b16 %v869
    %v1230 = vunpack.c.h.b16 %v869
    %v1231 = vunpack.c.l.b16 %v870
    %v1232 = vunpack.c.h.b16 %v870
    %v1233 = vunpack.c.l.b16 %v871
    %v1234 = vunpack.c.h.b16 %v871
    %v1235 = vunpack.c.l.b16 %v872
    %v1236 = vunpack.c.h.b16 %v872
    %v1237 = vunpack.c.l.b16 %v873
    %v1238 = vunpack.c.h.b16 %v873
    %v1239 = vunpack.c.l.b16 %v874
    %v1240 = vunpack.c.h.b16 %v874
    %v1241 = vunpack.c.l.b16 %v875
    %v1242 = vunpack.c.h.b16 %v875
    %v1243 = vunpack.c.l.b16 %v876
    %v1244 = vunpack.c.h.b16 %v876
    %v1245 = vunpack.c.l.b16 %v877
    %v1246 = vunpack.c.h.b16 %v877
    %v1247 = vunpack.c.l.b16 %v878
    %v1248 = vunpack.c.h.b16 %v878
    %v1249 = vunpack.c.l.b16 %v879
    %v1250 = vunpack.c.h.b16 %v879
    %v1251 = vpack.c.b16 %v1191, %v1187
    %v1252 = vpack.c.b16 %v1192, %v1188
    %v1253 = vpack.c.b16 %v1193, %v1189
    %v1254 = vpack.c.b16 %v1194, %v1190
    %v1255 = vpack.c.b16 %v1199, %v1195
    %v1256 = vpack.c.b16 %v1200, %v1196
    %v1257 = vpack.c.b16 %v1201, %v1197
    %v1258 = vpack.c.b16 %v1202, %v1198
    %v1259 = vpack.c.b16 %v1207, %v1203
    %v1260 = vpack.c.b16 %v1208, %v1204
    %v1261 = vpack.c.b16 %v1209, %v1205
    %v1262 = vpack.c.b16 %v1210, %v1206
    %v1263 = vpack.c.b16 %v1215, %v1211
    %v1264 = vpack.c.b16 %v1216, %v1212
    %v1265 = vpack.c.b16 %v1217, %v1213
    %v1266 = vpack.c.b16 %v1218, %v1214
    %v1267 = vpack.c.b16 %v1223, %v1219
    %v1268 = vpack.c.b16 %v1224, %v1220
    %v1269 = vpack.c.b16 %v1225, %v1221
    %v1270 = vpack.c.b16 %v1226, %v1222
    %v1271 = vpack.c.b16 %v1231, %v1227
    %v1272 = vpack.c.b16 %v1232, %v1228
    %v1273 = vpack.c.b16 %v1233, %v1229
    %v1274 = vpack.c.b16 %v1234, %v1230
    %v1275 = vpack.c.b16 %v1239, %v1235
    %v1276 = vpack.c.b16 %v1240, %v1236
    %v1277 = vpack.c.b16 %v1241, %v1237
    %v1278 = vpack.c.b16 %v1242, %v1238
    %v1279 = vpack.c.b16 %v1247, %v1243
    %v1280 = vpack.c.b16 %v1248, %v1244
    %v1281 = vpack.c.b16 %v1249, %v1245
    %v1282 = vpack.c.b16 %v1250, %v1246
    %1315 = vmatprep.subr.bf16.mxu0 %v1252
    %1316 = vmatpush1.bf16.msra.mxu0 %v1251
    %1317 = vmatprep.subr.bf16.mxu0 %v1256
    %1318 = vmatpush1.bf16.msra.mxu0 %v1255
    %1319 = vmatprep.subr.bf16.mxu0 %v1260
    %1320 = vmatpush1.bf16.msra.mxu0 %v1259
    %1321 = vmatprep.subr.bf16.mxu0 %v1264
    %1322 = vmatpush1.bf16.msra.mxu0 %v1263
    %1323 = vmatprep.subr.bf16.mxu0 %v1268
    %1324 = vmatpush1.bf16.msra.mxu0 %v1267
    %1325 = vmatprep.subr.bf16.mxu0 %v1272
    %1326 = vmatpush1.bf16.msra.mxu0 %v1271
    %1327 = vmatprep.subr.bf16.mxu0 %v1276
    %1328 = vmatpush1.bf16.msra.mxu0 %v1275
    %1329 = vmatprep.subr.bf16.mxu0 %v1280
    %1330 = vmatpush1.bf16.msra.mxu0 %v1279
    %1331 = vmatprep.subr.bf16.mxu0 0
    %1332 = vmatpush1.bf16.msra.mxu0 0
    %1333 = vmatprep.subr.bf16.mxu0 0
    %1334 = vmatpush1.bf16.msra.mxu0 0
    %1335 = vmatprep.subr.bf16.mxu0 0
    %1336 = vmatpush1.bf16.msra.mxu0 0
    %1337 = vmatprep.subr.bf16.mxu0 0
    %1338 = vmatpush1.bf16.msra.mxu0 0
    %1339 = vmatprep.subr.bf16.mxu0 0
    %1340 = vmatpush1.bf16.msra.mxu0 0
    %1341 = vmatprep.subr.bf16.mxu0 0
    %1342 = vmatpush1.bf16.msra.mxu0 0
    %1343 = vmatprep.subr.bf16.mxu0 0
    %1344 = vmatpush1.bf16.msra.mxu0 0
    %1345 = vmatprep.subr.bf16.mxu0 0
    %1346 = vmatpush1.bf16.msra.mxu0 0
    %1347 = vmatprep.mubr.bf16.mxu0 0
    %1348 = vmatmul.mubr.bf16.gmra.mrb[0].mxu0 %v847
    %v1349 = vpop.f32.mrb[0].mxu0
    %v1350 = vadd.f32 %v1108, %v1349
    %v1351 = vpop.f32.mrb[0].mxu0
    %v1352 = vadd.f32 %v1110, %v1351
    %v1353 = vpop.f32.mrb[0].mxu0
    %v1354 = vpop.f32.mrb[0].mxu0
    %1355 = vdwg.mxu0
    %1356 = vmatprep.subr.bf16.mxu0 %v1254
    %1357 = vmatpush1.bf16.msra.mxu0 %v1253
    %1358 = vmatprep.subr.bf16.mxu0 %v1258
    %1359 = vmatpush1.bf16.msra.mxu0 %v1257
    %1360 = vmatprep.subr.bf16.mxu0 %v1262
    %1361 = vmatpush1.bf16.msra.mxu0 %v1261
    %1362 = vmatprep.subr.bf16.mxu0 %v1266
    %1363 = vmatpush1.bf16.msra.mxu0 %v1265
    %1364 = vmatprep.subr.bf16.mxu0 %v1270
    %1365 = vmatpush1.bf16.msra.mxu0 %v1269
    %1366 = vmatprep.subr.bf16.mxu0 %v1274
    %1367 = vmatpush1.bf16.msra.mxu0 %v1273
    %1368 = vmatprep.subr.bf16.mxu0 %v1278
    %1369 = vmatpush1.bf16.msra.mxu0 %v1277
    %1370 = vmatprep.subr.bf16.mxu0 %v1282
    %1371 = vmatpush1.bf16.msra.mxu0 %v1281
    %1372 = vmatprep.subr.bf16.mxu0 0
    %1373 = vmatpush1.bf16.msra.mxu0 0
    %1374 = vmatprep.subr.bf16.mxu0 0
    %1375 = vmatpush1.bf16.msra.mxu0 0
    %1376 = vmatprep.subr.bf16.mxu0 0
    %1377 = vmatpush1.bf16.msra.mxu0 0
    %1378 = vmatprep.subr.bf16.mxu0 0
    %1379 = vmatpush1.bf16.msra.mxu0 0
    %1380 = vmatprep.subr.bf16.mxu0 0
    %1381 = vmatpush1.bf16.msra.mxu0 0
    %1382 = vmatprep.subr.bf16.mxu0 0
    %1383 = vmatpush1.bf16.msra.mxu0 0
    %1384 = vmatprep.subr.bf16.mxu0 0
    %1385 = vmatpush1.bf16.msra.mxu0 0
    %1386 = vmatprep.subr.bf16.mxu0 0
    %1387 = vmatpush1.bf16.msra.mxu0 0
    %1388 = vmatprep.mubr.bf16.mxu0 0
    %1389 = vmatmul.mubr.bf16.gmra.mrb[0].mxu0 %v847
    %v1390 = vpop.f32.mrb[0].mxu0
    %v1391 = vadd.f32 %v1149, %v1390
    %v1392 = vpop.f32.mrb[0].mxu0
    %v1393 = vadd.f32 %v1151, %v1392
    %v1394 = vpop.f32.mrb[0].mxu0
    %v1395 = vpop.f32.mrb[0].mxu0
    %1396 = vdwg.mxu0
    %v1397 = vld [vmem:[#allocation9] sm:$0xf]
    %v1399 = vlaneseq
    %v1400 = vshrl.u32 %v1399, 7
    %v1401 = vsub.s32 0, %v1400
    %v1402 = vrot.slane %v1397, %v1401
    %v1403 = vlaneseq
    %v1404 = vshrl.u32 %v1403, 7
    %v1405 = vsub.s32 1, %v1404
    %v1406 = vrot.slane %v1397, %v1405
    %v1407 = vlaneseq
    %v1408 = vshrl.u32 %v1407, 7
    %v1409 = vsub.s32 2, %v1408
    %v1410 = vrot.slane %v1397, %v1409
    %v1411 = vlaneseq
    %v1412 = vshrl.u32 %v1411, 7
    %v1413 = vsub.s32 3, %v1412
    %v1414 = vrot.slane %v1397, %v1413
    %v1419 = vadd.f32 %v1350, %v1402
    %v1420 = vadd.f32 %v1352, %v1406
    %v1421 = vadd.f32 %v1391, %v1410
    %v1422 = vadd.f32 %v1393, %v1414
    %v1423 = vxor.u32 %v1419, 2147483648
    %v1424 = vmul.f32 %v1423, 1.442695
    %v1425 = vpow.pop %v1424
    %v1426 = vadd.f32 %v1425, 1.0
    %v1427 = vrcp.pop %v1426
    %v1428 = vmul.f32 1.0, %v1427
    %v1429 = vxor.u32 %v1420, 2147483648
    %v1430 = vmul.f32 %v1429, 1.442695
    %v1431 = vpow.pop %v1430
    %v1432 = vadd.f32 %v1431, 1.0
    %v1433 = vrcp.pop %v1432
    %v1434 = vmul.f32 1.0, %v1433
    %v1435 = vtanh.pop %v1421
    %v1436 = vxor.u32 %v1422, 2147483648
    %v1437 = vmul.f32 %v1436, 1.442695
    %v1438 = vpow.pop %v1437
    %v1439 = vadd.f32 %v1438, 1.0
    %v1440 = vrcp.pop %v1439
    %v1441 = vmul.f32 1.0, %v1440
    %v1442 = vmul.f32 %v1434, %v846
    %v1443 = vmul.f32 %v1428, %v1435
    %v1444 = vadd.f32 %v1442, %v1443
    %v1445 = vtanh.pop %v1444
    %v1446 = vmul.f32 %v1441, %v1445
    %s1447 = scalar_lea.vmem %s13, 8
    %1448 = vst [vmem:[%s1447] sm:$0xff] %v1446
    %s1449 = scalar_lea.vmem %s14, 8
    %1450 = vst [vmem:[%s1449] sm:$0xff] %v1444
    %v1451 = vpack.c.bf16 %v1446, %v1446
    %v1452 = vld [vmem:[#allocation10] sm:$0xf]
    %v1453 = vld [vmem:[#allocation10 + $0x4] sm:$0xf]
    %v1454 = vld [vmem:[#allocation10 + $0x8] sm:$0xf]
    %v1455 = vld [vmem:[#allocation10 + $0xc] sm:$0xf]
    %v1456 = vld [vmem:[#allocation10 + $0x10] sm:$0xf]
    %v1457 = vld [vmem:[#allocation10 + $0x14] sm:$0xf]
    %v1458 = vld [vmem:[#allocation10 + $0x18] sm:$0xf]
    %v1459 = vld [vmem:[#allocation10 + $0x1c] sm:$0xf]
    %v1460 = vld [vmem:[#allocation10 + $0x20] sm:$0xf]
    %v1461 = vld [vmem:[#allocation10 + $0x24] sm:$0xf]
    %v1462 = vld [vmem:[#allocation10 + $0x28] sm:$0xf]
    %v1463 = vld [vmem:[#allocation10 + $0x2c] sm:$0xf]
    %v1464 = vld [vmem:[#allocation10 + $0x30] sm:$0xf]
    %v1465 = vld [vmem:[#allocation10 + $0x34] sm:$0xf]
    %v1466 = vld [vmem:[#allocation10 + $0x38] sm:$0xf]
    %v1467 = vld [vmem:[#allocation10 + $0x3c] sm:$0xf]
    %v1468 = vld [vmem:[%s11] sm:$0x1]
    %v1470 = vlaneseq
    %v1471 = vshrl.u32 %v1470, 7
    %v1472 = vsub.s32 0, %v1471
    %v1473 = vrot.slane %v1468, %v1472
    %v1491 = vunpack.c.l.b16 %v1452
    %v1492 = vunpack.c.l.b16 %v1453
    %v1493 = vunpack.c.l.b16 %v1454
    %v1494 = vunpack.c.l.b16 %v1455
    %v1495 = vunpack.c.l.b16 %v1456
    %v1496 = vunpack.c.l.b16 %v1457
    %v1497 = vunpack.c.l.b16 %v1458
    %v1498 = vunpack.c.l.b16 %v1459
    %v1499 = vunpack.c.l.b16 %v1460
    %v1500 = vunpack.c.l.b16 %v1461
    %v1501 = vunpack.c.l.b16 %v1462
    %v1502 = vunpack.c.l.b16 %v1463
    %v1503 = vunpack.c.l.b16 %v1464
    %v1504 = vunpack.c.l.b16 %v1465
    %v1505 = vunpack.c.l.b16 %v1466
    %v1506 = vunpack.c.l.b16 %v1467
    %v1507 = vpack.c.b16 %v1492, %v1491
    %v1508 = vpack.c.b16 %v1494, %v1493
    %v1509 = vpack.c.b16 %v1496, %v1495
    %v1510 = vpack.c.b16 %v1498, %v1497
    %v1511 = vpack.c.b16 %v1500, %v1499
    %v1512 = vpack.c.b16 %v1502, %v1501
    %v1513 = vpack.c.b16 %v1504, %v1503
    %v1514 = vpack.c.b16 %v1506, %v1505
    %1523 = vmatprep.subr.bf16.mxu0 0
    %1524 = vmatpush1.bf16.msra.mxu0 %v1507
    %1525 = vmatprep.subr.bf16.mxu0 0
    %1526 = vmatpush1.bf16.msra.mxu0 %v1508
    %1527 = vmatprep.subr.bf16.mxu0 0
    %1528 = vmatpush1.bf16.msra.mxu0 %v1509
    %1529 = vmatprep.subr.bf16.mxu0 0
    %1530 = vmatpush1.bf16.msra.mxu0 %v1510
    %1531 = vmatprep.subr.bf16.mxu0 0
    %1532 = vmatpush1.bf16.msra.mxu0 %v1511
    %1533 = vmatprep.subr.bf16.mxu0 0
    %1534 = vmatpush1.bf16.msra.mxu0 %v1512
    %1535 = vmatprep.subr.bf16.mxu0 0
    %1536 = vmatpush1.bf16.msra.mxu0 %v1513
    %1537 = vmatprep.subr.bf16.mxu0 0
    %1538 = vmatpush1.bf16.msra.mxu0 %v1514
    %1539 = vmatprep.subr.bf16.mxu0 0
    %1540 = vmatpush1.bf16.msra.mxu0 0
    %1541 = vmatprep.subr.bf16.mxu0 0
    %1542 = vmatpush1.bf16.msra.mxu0 0
    %1543 = vmatprep.subr.bf16.mxu0 0
    %1544 = vmatpush1.bf16.msra.mxu0 0
    %1545 = vmatprep.subr.bf16.mxu0 0
    %1546 = vmatpush1.bf16.msra.mxu0 0
    %1547 = vmatprep.subr.bf16.mxu0 0
    %1548 = vmatpush1.bf16.msra.mxu0 0
    %1549 = vmatprep.subr.bf16.mxu0 0
    %1550 = vmatpush1.bf16.msra.mxu0 0
    %1551 = vmatprep.subr.bf16.mxu0 0
    %1552 = vmatpush1.bf16.msra.mxu0 0
    %1553 = vmatprep.subr.bf16.mxu0 0
    %1554 = vmatpush1.bf16.msra.mxu0 0
    %1555 = vmatprep.mubr.bf16.mxu0 0
    %1556 = vmatmul.mubr.bf16.gmra.mrb[0].mxu0 %v1451
    %v1557 = vpop.f32.mrb[0].mxu0
    %v1558 = vadd.f32 %v1473, %v1557
    %v1559 = vpop.f32.mrb[0].mxu0
    %v1560 = vpop.f32.mrb[0].mxu0
    %v1561 = vpop.f32.mrb[0].mxu0
    %1562 = vdwg.mxu0
    %1563 = vst [vmem:[%s12] sm:$0xff] %v1558
    // Predicated region
    $region74: #{decoder_forward.1} parent=1 // pred_check
      _
    $region75: #{decoder_forward.1} parent=1 // pred_check_branch
      %1565 = sbr.rel (0) target = $region77
    $region76: #{decoder_forward.1} parent=1 // pred_region
      _
    $region77: #{decoder_forward.1} parent=1 // pred_fallthru
      _
    // Predicated region
    $region78: #{decoder_forward.1} parent=1 // pred_check
      _
    $region79: #{decoder_forward.1} parent=1 // pred_check_branch
      %1567 = sbr.rel (0) target = $region81
    $region80: #{decoder_forward.1} parent=1 // pred_region
      _
    $region81: #{decoder_forward.1} parent=1 // pred_fallthru
      _
    // Predicated region
    $region82: #{decoder_forward.1} parent=1 // pred_check
      _
    $region83: #{decoder_forward.1} parent=1 // pred_check_branch
      %1569 = sbr.rel (0) target = $region85
    $region84: #{decoder_forward.1} parent=1 // pred_region
      _
    $region85: #{decoder_forward.1} parent=1 // pred_fallthru
      _
    // Predicated region
    $region86: #{decoder_forward.1} parent=1 // pred_check
      _
    $region87: #{decoder_forward.1} parent=1 // pred_check_branch
      %1571 = sbr.rel (0) target = $region89
    $region88: #{decoder_forward.1} parent=1 // pred_region
      _
    $region89: #{decoder_forward.1} parent=1 // pred_fallthru
      _
    // Predicated region
    $region90: #{decoder_forward.1} parent=1 // pred_check
      _
    $region91: #{decoder_forward.1} parent=1 // pred_check_branch
      %1573 = sbr.rel (0) target = $region93
    $region92: #{decoder_forward.1} parent=1 // pred_region
      _
    $region93: #{decoder_forward.1} parent=1 // pred_fallthru
      _
    // Predicated region
    $region94: #{decoder_forward.1} parent=1 // pred_check
      _
    $region95: #{decoder_forward.1} parent=1 // pred_check_branch
      %1575 = sbr.rel (0) target = $region97
    $region96: #{decoder_forward.1} parent=1 // pred_region
      _
    $region97: #{decoder_forward.1} parent=1 // pred_fallthru
      _
    %1576 = vsyncpa [#allocation3], 1
    %1577 = vsyncpa [#allocation5], 1
    %1578 = vsyncpa [#allocation8], 1
    %1579 = vsyncpa [#allocation11], 1

</llo_original>
